<compile_context>
chip_gen: v6e
topology: v6e:2x2x1
jax: 0.10.0
libtpu: 0.0.40
codegen_flags: <defaults>
</compile_context>

<pallas_src>
import functools

import jax
import jax.numpy as jnp
from jax.experimental import pallas as pl
from jax.experimental.pallas import tpu as pltpu

LEVEL_IN_CHANNELS = (192, 128, 96, 64, 32)
OUT_CHANNELS = 32
LEAKY_SLOPE = 0.1
EPS = 1e-8


def _partial_conv1x1_kernel(x_ref, m_ref, w_ref, b_ref, out_ref, outmask_ref):
    """One (Cin, ts) spatial tile -> (Cout, ts) PartialConv(1x1x1) + LeakyReLU."""
    x = x_ref[...]                    # (Cin, ts)  f32
    m = m_ref[...]                    # (Cin, ts)  f32
    w = w_ref[...]                    # (Cout, Cin) f32
    b = b_ref[...]                    # (Cout, 1)  f32

    cin = float(x.shape[0])           # slide_winsize = Cin * 1 * 1 * 1

    # conv(x * mask) WITHOUT bias: 1x1x1 conv == channel matmul on the MXU.
    raw = jnp.dot(w, x * m, preferred_element_type=jnp.float32)    # (Cout, ts)

    # update_mask = conv(mask, ones): identical for every output channel.
    msum = jnp.sum(m, axis=0, keepdims=True)                       # (1, ts)
    update_mask = jnp.clip(msum, 0.0, 1.0)
    mask_ratio = cin * pl.reciprocal(msum + EPS, approx=True) * update_mask

    # PartialConv bias handling: ((raw+b - b) * ratio + b) * update_mask
    # == (raw * ratio + b) * update_mask  (bias round-trip folded away).
    out = (raw * mask_ratio + b) * update_mask                     # (Cout, ts)

    # LeakyReLU(0.1)
    out = jnp.where(out >= 0.0, out, LEAKY_SLOPE * out)

    out_ref[...] = out.astype(out_ref.dtype)
    # NOTE: update_mask is identical across the 32 output channels; it is still
    # materialized here (dense lane-major store) to preserve the module's
    # (N, Cout, D, H, W) return-mask semantics inside a single HBM pass.
    outmask_ref[...] = jnp.broadcast_to(update_mask, out.shape).astype(outmask_ref.dtype)


@functools.partial(jax.jit, static_argnames=("ts",))
def feature_aggregator_forward(features, mask, weight, bias, ts=None):
    """PartialConv3d(k=1, multi_channel, return_mask, bias) + LeakyReLU(0.1).

    features, mask : (N, Cin, D, H, W)  float32
    weight         : (Cout, Cin, 1, 1, 1)
    bias           : (Cout,)
    returns        : (agg_features, agg_features_mask), both (N, Cout, D, H, W)
    """
    N, C, D, H, W = features.shape
    Cout = weight.shape[0]
    S = D * H * W

    # Spatial tile: large multiple of 128 on lanes (dense stores, low per-step
    # overhead), capped at 2048 so double-buffered working set (~7 MiB @ Cin=192)
    # fits every generation's scoped-VMEM default (v5e 16 MiB, v6e/v7x 32 MiB).
    if ts is None:
        ts = S if S <= 128 else min(2048, (S // 128) * 128)

    # Free reshapes only (no transpose, no pad): NCDHW -> (N, C, S).
    x3 = features.reshape(N, C, S).astype(jnp.float32)
    m3 = mask.reshape(N, C, S).astype(jnp.float32)
    w2d = weight.reshape(Cout, C).astype(jnp.float32)      # (Cout, Cin)
    b2d = bias.reshape(Cout, 1).astype(jnp.float32)        # (Cout, 1)

    grid = (N, pl.cdiv(S, ts))

    out, out_mask = pl.pallas_call(
        _partial_conv1x1_kernel,
        out_shape=(
            jax.ShapeDtypeStruct((N, Cout, S), jnp.float32),
            jax.ShapeDtypeStruct((N, Cout, S), jnp.float32),
        ),
        grid_spec=pltpu.PrefetchScalarGridSpec(
            num_scalar_prefetch=0,
            grid=grid,
            in_specs=[
                pl.BlockSpec((None, C, ts), lambda n, s: (n, 0, s)),   # features tile
                pl.BlockSpec((None, C, ts), lambda n, s: (n, 0, s)),   # mask tile
                pl.BlockSpec((Cout, C), lambda n, s: (0, 0)),          # weight (resident)
                pl.BlockSpec((Cout, 1), lambda n, s: (0, 0)),          # bias (resident)
            ],
            out_specs=[
                pl.BlockSpec((None, Cout, ts), lambda n, s: (n, 0, s)),
                pl.BlockSpec((None, Cout, ts), lambda n, s: (n, 0, s)),
            ],
        ),
        compiler_params=pltpu.CompilerParams(
            dimension_semantics=("parallel", "parallel"),
        ),
    )(x3, m3, w2d, b2d)

    out = out.reshape(N, Cout, D, H, W)
    out_mask = out_mask.reshape(N, Cout, D, H, W)
    return out, out_mask


def _reference_forward(features, mask, weight, bias):
    """Pure-JAX reference of PartialConv3d(k=1, multi_channel, bias) + LeakyReLU(0.1)."""
    N, C, D, H, W = features.shape
    Cout = weight.shape[0]
    w = weight.reshape(Cout, C).astype(jnp.float32)
    xm = (features * mask).reshape(N, C, -1)
    raw = jnp.einsum("oc,ncs->nos", w, xm)                          # (N, Cout, S)
    msum = jnp.sum(mask.reshape(N, C, -1), axis=1, keepdims=True)   # (N, 1, S)
    update_mask = jnp.clip(msum, 0.0, 1.0)
    mask_ratio = (C / (msum + EPS)) * update_mask
    b = bias.reshape(1, Cout, 1)
    out = (raw * mask_ratio + b) * update_mask
    out = jnp.where(out >= 0.0, out, LEAKY_SLOPE * out)
    out_mask = jnp.broadcast_to(update_mask, raw.shape)
    return (out.reshape(N, Cout, D, H, W),
            out_mask.reshape(N, Cout, D, H, W))


def init_feature_aggregator_params(key):
    """Deterministic parameters for all 5 levels (conv1..conv5)."""
    params = []
    for lvl, cin in enumerate(LEVEL_IN_CHANNELS):
        kw, kb = jax.random.split(jax.random.fold_in(key, lvl))
        fan_in = cin  # 1x1x1 kernel
        bound = 1.0 / (fan_in ** 0.5)
        w = jax.random.uniform(kw, (OUT_CHANNELS, cin, 1, 1, 1),
                               minval=-bound, maxval=bound, dtype=jnp.float32)
        b = jax.random.uniform(kb, (OUT_CHANNELS,),
                               minval=-bound, maxval=bound, dtype=jnp.float32)
        params.append((w, b))
    return params


class FeatureAggregator:
    """JAX/Pallas port of the PyTorch FeatureAggregator module."""

    def __init__(self, key):
        self.params = init_feature_aggregator_params(key)

    def __call__(self, features, mask, level):
        w, b = self.params[level]
        return feature_aggregator_forward(features, mask, w, b)


if __name__ == "__main__":
    key = jax.random.PRNGKey(0)
    agg = FeatureAggregator(key)

    # Small NCDHW volumes; S = D*H*W = 1024 spatial positions per batch element.
    N, D, H, W = 2, 4, 16, 16
    for level in (0, 1, 4):  # Cin = 192, 128, 32
        cin = LEVEL_IN_CHANNELS[level]
        kf, km = jax.random.split(jax.random.fold_in(key, 100 + level))
        features = jax.random.normal(kf, (N, cin, D, H, W), dtype=jnp.float32)
        mask = (jax.random.uniform(km, (N, cin, D, H, W)) > 0.3).astype(jnp.float32)

        out, out_mask = agg(features, mask, level)
        out = jax.block_until_ready(out)
        out_mask = jax.block_until_ready(out_mask)

        assert out.shape == (N, OUT_CHANNELS, D, H, W)
        assert out_mask.shape == (N, OUT_CHANNELS, D, H, W)
        assert bool(jnp.all(jnp.isfinite(out)))

        # Correctness vs pure-JAX reference (loose tol for approx reciprocal / MXU order).
        w_p, b_p = agg.params[level]
        ref_out, ref_mask = _reference_forward(features, mask, w_p, b_p)
        assert bool(jnp.allclose(out, ref_out, rtol=2e-2, atol=2e-2)), (
            f"level {level}: max abs diff {float(jnp.max(jnp.abs(out - ref_out)))}")
        assert bool(jnp.allclose(out_mask, ref_mask)), f"level {level}: mask mismatch"

    print("KERNEL_OK")
</pallas_src>

<mosaic_0001>
module attributes {stable_mosaic.version = 11 : i64} {
  func.func @_partial_conv1x1_kernel(%arg0: i32, %arg1: i32, %arg2: memref<1x192x1024xf32, #tpu.memory_space<vmem>>, %arg3: memref<1x192x1024xf32, #tpu.memory_space<vmem>>, %arg4: memref<32x192xf32, #tpu.memory_space<vmem>>, %arg5: memref<32x1xf32, #tpu.memory_space<vmem>>, %arg6: memref<1x32x1024xf32, #tpu.memory_space<vmem>>, %arg7: memref<1x32x1024xf32, #tpu.memory_space<vmem>>) attributes {dimension_semantics = [#tpu.dimension_semantics<parallel>, #tpu.dimension_semantics<parallel>], iteration_bounds = array<i64: 2, 1>, scalar_prefetch = 0 : i64, scratch_operands = 0 : i64, tpu.core_type = #tpu.core_type<tc>, window_params = [{transform_indices = @transform_0, window_bounds = array<i64: 1, 192, 1024>}, {transform_indices = @transform_1, window_bounds = array<i64: 1, 192, 1024>}, {pipeline_mode = #tpu.pipeline_mode<synchronous>, transform_indices = @transform_2, window_bounds = array<i64: 32, 192>}, {pipeline_mode = #tpu.pipeline_mode<synchronous>, transform_indices = @transform_3, window_bounds = array<i64: 32, 1>}, {transform_indices = @transform_4, window_bounds = array<i64: 1, 32, 1024>}, {transform_indices = @transform_5, window_bounds = array<i64: 1, 32, 1024>}]} {
    %c0 = arith.constant 0 : index
    %c0_0 = arith.constant 0 : index
    %c0_1 = arith.constant 0 : index
    %0 = vector.load %arg2[%c0, %c0_0, %c0_1] : memref<1x192x1024xf32, #tpu.memory_space<vmem>>, vector<1x192x1024xf32>
    %1 = vector.shape_cast %0 : vector<1x192x1024xf32> to vector<192x1024xf32>
    %c0_2 = arith.constant 0 : index
    %c0_3 = arith.constant 0 : index
    %c0_4 = arith.constant 0 : index
    %2 = vector.load %arg3[%c0_2, %c0_3, %c0_4] : memref<1x192x1024xf32, #tpu.memory_space<vmem>>, vector<1x192x1024xf32>
    %3 = vector.shape_cast %2 : vector<1x192x1024xf32> to vector<192x1024xf32>
    %c0_5 = arith.constant 0 : index
    %c0_6 = arith.constant 0 : index
    %4 = vector.load %arg4[%c0_5, %c0_6] : memref<32x192xf32, #tpu.memory_space<vmem>>, vector<32x192xf32>
    %c0_7 = arith.constant 0 : index
    %c0_8 = arith.constant 0 : index
    %5 = vector.load %arg5[%c0_7, %c0_8] : memref<32x1xf32, #tpu.memory_space<vmem>>, vector<32x1xf32>
    %6 = arith.mulf %1, %3 : vector<192x1024xf32>
    %cst = arith.constant dense<0.000000e+00> : vector<32x1024xf32>
    %7 = tpu.matmul %4, %6, %cst {dimension_numbers = #tpu.dot_dimension_numbers<[1], [0], [0], [1], [0, 0, 1, 1], [], []>} : vector<32x192xf32>, vector<192x1024xf32>, vector<32x1024xf32> -> vector<32x1024xf32>
    %cst_9 = arith.constant dense<0.000000e+00> : vector<1024xf32>
    %8 = vector.multi_reduction <add>, %3, %cst_9 [0] : vector<192x1024xf32> to vector<1024xf32>
    %9 = vector.shape_cast %8 : vector<1024xf32> to vector<1x1024xf32>
    %cst_10 = arith.constant 0.000000e+00 : f32
    %cst_11 = arith.constant 1.000000e+00 : f32
    %10 = vector.broadcast %cst_10 : f32 to vector<1x1024xf32>
    %11 = arith.maximumf %10, %9 : vector<1x1024xf32>
    %12 = vector.broadcast %cst_11 : f32 to vector<1x1024xf32>
    %13 = arith.minimumf %12, %11 : vector<1x1024xf32>
    %cst_12 = arith.constant 9.99999993E-9 : f32
    %14 = vector.broadcast %cst_12 : f32 to vector<1x1024xf32>
    %15 = arith.addf %9, %14 : vector<1x1024xf32>
    %16 = tpu.reciprocal %15 {approx = true} : vector<1x1024xf32> -> vector<1x1024xf32>
    %cst_13 = arith.constant 1.920000e+02 : f32
    %17 = vector.broadcast %cst_13 : f32 to vector<1x1024xf32>
    %18 = arith.mulf %17, %16 : vector<1x1024xf32>
    %19 = arith.mulf %18, %13 : vector<1x1024xf32>
    %20 = vector.broadcast %19 : vector<1x1024xf32> to vector<32x1024xf32>
    %21 = arith.mulf %7, %20 : vector<32x1024xf32>
    %22 = vector.broadcast %5 : vector<32x1xf32> to vector<32x1024xf32>
    %23 = arith.addf %21, %22 : vector<32x1024xf32>
    %24 = vector.broadcast %13 : vector<1x1024xf32> to vector<32x1024xf32>
    %25 = arith.mulf %23, %24 : vector<32x1024xf32>
    %cst_14 = arith.constant 0.000000e+00 : f32
    %26 = vector.broadcast %cst_14 : f32 to vector<32x1024xf32>
    %27 = arith.cmpf oge, %25, %26 : vector<32x1024xf32>
    %cst_15 = arith.constant 1.000000e-01 : f32
    %28 = vector.broadcast %cst_15 : f32 to vector<32x1024xf32>
    %29 = arith.mulf %28, %25 : vector<32x1024xf32>
    %30 = arith.select %27, %25, %29 : vector<32x1024xi1>, vector<32x1024xf32>
    %c0_16 = arith.constant 0 : index
    %c0_17 = arith.constant 0 : index
    %c0_18 = arith.constant 0 : index
    %31 = vector.load %arg6[%c0_16, %c0_17, %c0_18] : memref<1x32x1024xf32, #tpu.memory_space<vmem>>, vector<1x32x1024xf32>
    %32 = vector.shape_cast %31 : vector<1x32x1024xf32> to vector<32x1024xf32>
    %33 = vector.shape_cast %30 : vector<32x1024xf32> to vector<1x32x1024xf32>
    tpu.vector_store %arg6[%c0_16, %c0_17, %c0_18], %33 {strides = array<i32>} : memref<1x32x1024xf32, #tpu.memory_space<vmem>>, vector<1x32x1024xf32>,
    %34 = vector.shape_cast %13 : vector<1x1024xf32> to vector<1x1024xf32>
    %35 = vector.broadcast %34 : vector<1x1024xf32> to vector<32x1024xf32>
    %c0_19 = arith.constant 0 : index
    %c0_20 = arith.constant 0 : index
    %c0_21 = arith.constant 0 : index
    %36 = vector.load %arg7[%c0_19, %c0_20, %c0_21] : memref<1x32x1024xf32, #tpu.memory_space<vmem>>, vector<1x32x1024xf32>
    %37 = vector.shape_cast %36 : vector<1x32x1024xf32> to vector<32x1024xf32>
    %38 = vector.shape_cast %35 : vector<32x1024xf32> to vector<1x32x1024xf32>
    tpu.vector_store %arg7[%c0_19, %c0_20, %c0_21], %38 {strides = array<i32>} : memref<1x32x1024xf32, #tpu.memory_space<vmem>>, vector<1x32x1024xf32>,
    return
  }
  func.func @transform_0(%arg0: i32, %arg1: i32) -> (i32, i32, i32) {
    %c0_i32 = arith.constant 0 : i32
    %c0_i32_0 = arith.constant 0 : i32
    return %arg0, %c0_i32, %arg1 : i32, i32, i32
  }
  func.func @transform_1(%arg0: i32, %arg1: i32) -> (i32, i32, i32) {
    %c0_i32 = arith.constant 0 : i32
    %c0_i32_0 = arith.constant 0 : i32
    return %arg0, %c0_i32, %arg1 : i32, i32, i32
  }
  func.func @transform_2(%arg0: i32, %arg1: i32) -> (i32, i32) {
    %c0_i32 = arith.constant 0 : i32
    %c0_i32_0 = arith.constant 0 : i32
    %c0_i32_1 = arith.constant 0 : i32
    return %c0_i32, %c0_i32_0 : i32, i32
  }
  func.func @transform_3(%arg0: i32, %arg1: i32) -> (i32, i32) {
    %c0_i32 = arith.constant 0 : i32
    %c0_i32_0 = arith.constant 0 : i32
    %c0_i32_1 = arith.constant 0 : i32
    return %c0_i32, %c0_i32_0 : i32, i32
  }
  func.func @transform_4(%arg0: i32, %arg1: i32) -> (i32, i32, i32) {
    %c0_i32 = arith.constant 0 : i32
    %c0_i32_0 = arith.constant 0 : i32
    return %arg0, %c0_i32, %arg1 : i32, i32, i32
  }
  func.func @transform_5(%arg0: i32, %arg1: i32) -> (i32, i32, i32) {
    %c0_i32 = arith.constant 0 : i32
    %c0_i32_0 = arith.constant 0 : i32
    return %arg0, %c0_i32, %arg1 : i32, i32, i32
  }
}

</mosaic_0001>

<llo_original>
// kernel: feature_aggregator_forward.1
$region0: #{feature_aggregator_forward.1}
  #allocation0 [shape = 'u32[]', space=smem, size = 0x4, offset = 0x4, fixed_abs, tag = 'smem constant byte address 0x4 - core index']
  #allocation1 [shape = 'u32[144,128]{1,0:T(1,128)}', space=vmem, size = 0x12000, scoped, tag = 'internal scratch']
  %s0 = inlined_call_operand.vmem [shape: f32[2,192,1024], index: 0, kind: input, shape index: {}]
  %s1 = inlined_call_operand.vmem [shape: f32[2,192,1024], index: 1, kind: input, shape index: {}]
  %s2 = inlined_call_operand.vmem [shape: f32[32,192], index: 2, kind: input, shape index: {}]
  %s3 = inlined_call_operand.vmem [shape: f32[32,1], index: 3, kind: input, shape index: {}]
  %s4 = inlined_call_operand.vmem [shape: f32[2,32,1024], index: 4, kind: output, shape index: {0}]
  %s5 = inlined_call_operand.vmem [shape: f32[2,32,1024], index: 5, kind: output, shape index: {1}]
  %6 = xla_tuple %s4, %s5
  %s7 = sld [smem:[#allocation0]]
  $region57: #{feature_aggregator_forward.1} parent=0
    _
  %s9 = ssub.s32 1, %s7
  %s10 = scalar_select 0, %s9, %s7
  loop: start=0, step=1, limit=4
  $region2: #{feature_aggregator_forward.1} parent=0 // loop_pre_header
    _
  $region3: #{feature_aggregator_forward.1} parent=0 // loop_header
    %s12 = sphi 0, %s16
    %p13 = scmp.ge.s32.totalorder %s12, 4
    %s19 = sphi 0, %s31
    %s20 = sphi 0, %s27
    %s21 = sphi 0, %s19
    %s22 = sphi 0, %s20
    %s23 = sphi 0, %s21
    %s24 = sphi 0, %s22
    %s36 = sphi 0, %s38
    %s39 = sphi 0, %s36
    %s40 = sphi 0, %s39
    %s56 = sphi 0, %s40
    %s64 = sphi 0, %s66
    %s67 = sphi 0, %s64
    %s68 = sphi 0, %s67
    %s84 = sphi 0, %s68
    %s88 = sphi 0, %s88
    %s90 = sphi 0, %s88
    %s91 = sphi 0, %s90
    %s105 = sphi 0, %s91
    %s109 = sphi 0, %s109
    %s111 = sphi 0, %s109
    %s112 = sphi 0, %s111
    %s126 = sphi 0, %s112
    %s134 = sphi 0, %s136
    %s137 = sphi 0, %s134
    %s138 = sphi 0, %s137
    %s154 = sphi 0, %s138
    %s162 = sphi 0, %s164
    %s165 = sphi 0, %s162
    %s166 = sphi 0, %s165
    %s182 = sphi 0, %s166
  $region4: #{feature_aggregator_forward.1} parent=0 // loop_header_branch
    %15 = sbr.rel (%p13) target = $region8
  $region5: #{feature_aggregator_forward.1} parent=0 // loop_body
    %s17 = ssub.s32 %s12, 1
    %s18 = ssub.s32 %s12, 2
    %s25 = sadd.s32 1, %s20
    %p26 = scmp.ge.s32.totalorder %s25, 1
    %s27 = scalar_select %p26, 0, %s25
    %s28 = sadd.s32 1, %s19
    %s29 = scalar_select %p26, %s28, %s19
    %p30 = scmp.ge.s32.totalorder %s29, 2
    %s31 = scalar_select %p30, 0, %s29
    %s32 = ssub.s32 %s19, %s31
    %s33 = ssub.s32 %s20, %s27
    %s34 = sor.u32 %s32, %s33
    %p35 = scmp.eq.s32.totalorder %s34, 0
    %s37 = sadd.s32 %s36, 1
    %s38 = scalar_select %p35, %s36, %s37
    %p41 = pneg %p35
    %p42 = scmp.eq.s32.totalorder %s12, 1
    %p43 = por %p41, %p42
    %p44 = scmp.ne.s32.totalorder %s36, %s39
    %p45 = scmp.eq.s32.totalorder %s12, 0
    %p46 = por %p44, %p45
    %p47 = scmp.ne.s32.totalorder %s36, %s39
    %p48 = scmp.eq.s32.totalorder %s17, 1
    %p49 = por %p47, %p48
    %p50 = scmp.ne.s32.totalorder %s39, %s40
    %p51 = scmp.eq.s32.totalorder %s17, 0
    %p52 = por %p50, %p51
    %p53 = scmp.ne.s32.totalorder %s39, %s40
    %p54 = scmp.eq.s32.totalorder %s18, 1
    %p55 = por %p53, %p54
    %p57 = scmp.ne.s32.totalorder %s40, %s56
    %p58 = scmp.eq.s32.totalorder %s18, 0
    %p59 = por %p57, %p58
    %s60 = ssub.s32 %s19, %s31
    %s61 = ssub.s32 %s20, %s27
    %s62 = sor.u32 %s60, %s61
    %p63 = scmp.eq.s32.totalorder %s62, 0
    %s65 = sadd.s32 %s64, 1
    %s66 = scalar_select %p63, %s64, %s65
    %p69 = pneg %p63
    %p70 = scmp.eq.s32.totalorder %s12, 1
    %p71 = por %p69, %p70
    %p72 = scmp.ne.s32.totalorder %s64, %s67
    %p73 = scmp.eq.s32.totalorder %s12, 0
    %p74 = por %p72, %p73
    %p75 = scmp.ne.s32.totalorder %s64, %s67
    %p76 = scmp.eq.s32.totalorder %s17, 1
    %p77 = por %p75, %p76
    %p78 = scmp.ne.s32.totalorder %s67, %s68
    %p79 = scmp.eq.s32.totalorder %s17, 0
    %p80 = por %p78, %p79
    %p81 = scmp.ne.s32.totalorder %s67, %s68
    %p82 = scmp.eq.s32.totalorder %s18, 1
    %p83 = por %p81, %p82
    %p85 = scmp.ne.s32.totalorder %s68, %s84
    %p86 = scmp.eq.s32.totalorder %s18, 0
    %p87 = por %p85, %p86
    %s89 = sadd.s32 %s88, 1
    %p92 = scmp.eq.s32.totalorder %s12, 1
    %p93 = scmp.ne.s32.totalorder %s88, %s90
    %p94 = scmp.eq.s32.totalorder %s12, 0
    %p95 = por %p93, %p94
    %p96 = scmp.ne.s32.totalorder %s88, %s90
    %p97 = scmp.eq.s32.totalorder %s17, 1
    %p98 = por %p96, %p97
    %p99 = scmp.ne.s32.totalorder %s90, %s91
    %p100 = scmp.eq.s32.totalorder %s17, 0
    %p101 = por %p99, %p100
    %p102 = scmp.ne.s32.totalorder %s90, %s91
    %p103 = scmp.eq.s32.totalorder %s18, 1
    %p104 = por %p102, %p103
    %p106 = scmp.ne.s32.totalorder %s91, %s105
    %p107 = scmp.eq.s32.totalorder %s18, 0
    %p108 = por %p106, %p107
    %s110 = sadd.s32 %s109, 1
    %p113 = scmp.eq.s32.totalorder %s12, 1
    %p114 = scmp.ne.s32.totalorder %s109, %s111
    %p115 = scmp.eq.s32.totalorder %s12, 0
    %p116 = por %p114, %p115
    %p117 = scmp.ne.s32.totalorder %s109, %s111
    %p118 = scmp.eq.s32.totalorder %s17, 1
    %p119 = por %p117, %p118
    %p120 = scmp.ne.s32.totalorder %s111, %s112
    %p121 = scmp.eq.s32.totalorder %s17, 0
    %p122 = por %p120, %p121
    %p123 = scmp.ne.s32.totalorder %s111, %s112
    %p124 = scmp.eq.s32.totalorder %s18, 1
    %p125 = por %p123, %p124
    %p127 = scmp.ne.s32.totalorder %s112, %s126
    %p128 = scmp.eq.s32.totalorder %s18, 0
    %p129 = por %p127, %p128
    %s130 = ssub.s32 %s19, %s31
    %s131 = ssub.s32 %s20, %s27
    %s132 = sor.u32 %s130, %s131
    %p133 = scmp.eq.s32.totalorder %s132, 0
    %s135 = sadd.s32 %s134, 1
    %s136 = scalar_select %p133, %s134, %s135
    %p139 = pneg %p133
    %p140 = scmp.eq.s32.totalorder %s12, 1
    %p141 = por %p139, %p140
    %p142 = scmp.ne.s32.totalorder %s134, %s137
    %p143 = scmp.eq.s32.totalorder %s12, 0
    %p144 = por %p142, %p143
    %p145 = scmp.ne.s32.totalorder %s134, %s137
    %p146 = scmp.eq.s32.totalorder %s17, 1
    %p147 = por %p145, %p146
    %p148 = scmp.ne.s32.totalorder %s137, %s138
    %p149 = scmp.eq.s32.totalorder %s17, 0
    %p150 = por %p148, %p149
    %p151 = scmp.ne.s32.totalorder %s137, %s138
    %p152 = scmp.eq.s32.totalorder %s18, 1
    %p153 = por %p151, %p152
    %p155 = scmp.ne.s32.totalorder %s138, %s154
    %p156 = scmp.eq.s32.totalorder %s18, 0
    %p157 = por %p155, %p156
    %s158 = ssub.s32 %s19, %s31
    %s159 = ssub.s32 %s20, %s27
    %s160 = sor.u32 %s158, %s159
    %p161 = scmp.eq.s32.totalorder %s160, 0
    %s163 = sadd.s32 %s162, 1
    %s164 = scalar_select %p161, %s162, %s163
    %p167 = pneg %p161
    %p168 = scmp.eq.s32.totalorder %s12, 1
    %p169 = por %p167, %p168
    %p170 = scmp.ne.s32.totalorder %s162, %s165
    %p171 = scmp.eq.s32.totalorder %s12, 0
    %p172 = por %p170, %p171
    %p173 = scmp.ne.s32.totalorder %s162, %s165
    %p174 = scmp.eq.s32.totalorder %s17, 1
    %p175 = por %p173, %p174
    %p176 = scmp.ne.s32.totalorder %s165, %s166
    %p177 = scmp.eq.s32.totalorder %s17, 0
    %p178 = por %p176, %p177
    %p179 = scmp.ne.s32.totalorder %s165, %s166
    %p180 = scmp.eq.s32.totalorder %s18, 1
    %p181 = por %p179, %p180
    %p183 = scmp.ne.s32.totalorder %s166, %s182
    %p184 = scmp.eq.s32.totalorder %s18, 0
    %p185 = por %p183, %p184
    %p186 = scmp.le.s32.totalorder 1, %s12
    %p187 = scmp.lt.s32.totalorder %s12, 3
    %p188 = pnand %p186, %p187
    %p189 = pneg %p188
    // Predicated region
    $region9: #{feature_aggregator_forward.1} parent=5 // pred_check
      _
    $region10: #{feature_aggregator_forward.1} parent=5 // pred_check_branch
      %191 = sbr.rel (%p188) target = $region12
    $region11: #{feature_aggregator_forward.1} parent=5 // pred_region
      %s192 = ssub.s32 %s12, 1
      // Predicated region
      $region13: #{feature_aggregator_forward.1} parent=11 // pred_check
        %p193 = pneg %p101
      $region14: #{feature_aggregator_forward.1} parent=11 // pred_check_branch
        %195 = sbr.rel (%p193) target = $region16
      $region15: #{feature_aggregator_forward.1} parent=11 // pred_region
        _
      $region16: #{feature_aggregator_forward.1} parent=11 // pred_fallthru
        _
      // Predicated region
      $region17: #{feature_aggregator_forward.1} parent=11 // pred_check
        %p196 = pneg %p122
      $region18: #{feature_aggregator_forward.1} parent=11 // pred_check_branch
        %198 = sbr.rel (%p196) target = $region20
      $region19: #{feature_aggregator_forward.1} parent=11 // pred_region
        _
      $region20: #{feature_aggregator_forward.1} parent=11 // pred_fallthru
        _
    $region12: #{feature_aggregator_forward.1} parent=5 // pred_fallthru
      _
    %p199 = scmp.lt.s32.totalorder %s12, 2
    // Predicated region
    $region21: #{feature_aggregator_forward.1} parent=5 // pred_check
      %p200 = pneg %p199
    $region22: #{feature_aggregator_forward.1} parent=5 // pred_check_branch
      %202 = sbr.rel (%p200) target = $region24
    $region23: #{feature_aggregator_forward.1} parent=5 // pred_region
      // Predicated region
      $region25: #{feature_aggregator_forward.1} parent=23 // pred_check
        %p203 = pneg %p46
      $region26: #{feature_aggregator_forward.1} parent=23 // pred_check_branch
        %205 = sbr.rel (%p203) target = $region28
      $region27: #{feature_aggregator_forward.1} parent=23 // pred_region
        %s206 = smul.u32 8, %s20
        %p207 = scmp.lt.s32.totalorder %s19, 1
        %s208 = scalar_select %p207, %s19, 1
        %p209 = scmp.lt.s32.totalorder %s206, 7
        %s210 = scalar_select %p209, %s206, 7
        %s211 = smul.addr %s208, 192
        %s212 = sadd.s32 %s210, %s211
        %s213 = smul.addr %s212, 8
        %s214 = scalar_lea.vmem %s0, %s213
        %s215 = smul.u32 8, %s20
      $region28: #{feature_aggregator_forward.1} parent=23 // pred_fallthru
        _
      // Predicated region
      $region29: #{feature_aggregator_forward.1} parent=23 // pred_check
        %p216 = pneg %p74
      $region30: #{feature_aggregator_forward.1} parent=23 // pred_check_branch
        %218 = sbr.rel (%p216) target = $region32
      $region31: #{feature_aggregator_forward.1} parent=23 // pred_region
        %s219 = smul.u32 8, %s20
        %p220 = scmp.lt.s32.totalorder %s19, 1
        %s221 = scalar_select %p220, %s19, 1
        %p222 = scmp.lt.s32.totalorder %s219, 7
        %s223 = scalar_select %p222, %s219, 7
        %s224 = smul.addr %s221, 192
        %s225 = sadd.s32 %s223, %s224
        %s226 = smul.addr %s225, 8
        %s227 = scalar_lea.vmem %s1, %s226
        %s228 = smul.u32 8, %s20
      $region32: #{feature_aggregator_forward.1} parent=23 // pred_fallthru
        _
    $region24: #{feature_aggregator_forward.1} parent=5 // pred_fallthru
      _
    %p229 = scmp.le.s32.totalorder 1, %s12
    %p230 = scmp.lt.s32.totalorder %s12, 3
    %p231 = pnand %p229, %p230
    %p232 = pneg %p231
    // Predicated region
    $region33: #{feature_aggregator_forward.1} parent=5 // pred_check
      _
    $region34: #{feature_aggregator_forward.1} parent=5 // pred_check_branch
      %234 = sbr.rel (%p231) target = $region36
    $region35: #{feature_aggregator_forward.1} parent=5 // pred_region
      %s235 = ssub.s32 %s12, 1
      %s236 = smul.u32 8, %s22
      %p237 = scmp.lt.s32.totalorder %s21, 1
      %s238 = scalar_select %p237, %s21, 1
      %p239 = scmp.lt.s32.totalorder %s236, 7
      %s240 = scalar_select %p239, %s236, 7
      %s241 = smul.addr %s238, 192
      %s242 = sadd.s32 %s240, %s241
      %s243 = smul.addr %s242, 8
      %s244 = scalar_lea.vmem %s0, %s243
      %p245 = pneg %p52
      %p246 = pneg %p49
      %s247 = smul.u32 8, %s22
      %p248 = scmp.lt.s32.totalorder %s21, 1
      %s249 = scalar_select %p248, %s21, 1
      %p250 = scmp.lt.s32.totalorder %s247, 7
      %s251 = scalar_select %p250, %s247, 7
      %s252 = smul.addr %s249, 192
      %s253 = sadd.s32 %s251, %s252
      %s254 = smul.addr %s253, 8
      %s255 = scalar_lea.vmem %s1, %s254
      %p256 = pneg %p80
      %p257 = pneg %p77
      %p258 = pneg %p101
      %p259 = pneg %p98
      %p260 = pneg %p122
      %p261 = pneg %p119
      %p262 = pneg %p150
      %p263 = pneg %p147
      %s264 = smul.u32 8, %s22
      %p265 = scmp.lt.s32.totalorder %s21, 1
      %s266 = scalar_select %p265, %s21, 1
      %p267 = scmp.lt.s32.totalorder %s264, 7
      %s268 = scalar_select %p267, %s264, 7
      %s269 = smul.addr %s266, 32
      %s270 = sadd.s32 %s268, %s269
      %s271 = smul.addr %s270, 8
      %s272 = scalar_lea.vmem %s4, %s271
      %p273 = pneg %p178
      %p274 = pneg %p175
      %s275 = smul.u32 8, %s22
      %p276 = scmp.lt.s32.totalorder %s21, 1
      %s277 = scalar_select %p276, %s21, 1
      %p278 = scmp.lt.s32.totalorder %s275, 7
      %s279 = scalar_select %p278, %s275, 7
      %s280 = smul.addr %s277, 32
      %s281 = sadd.s32 %s279, %s280
      %s282 = smul.addr %s281, 8
      %s283 = scalar_lea.vmem %s5, %s282
      %s284 = smul.u32 8, %s22
      %p285 = scmp.lt.s32.totalorder %s21, 1
      %s286 = scalar_select %p285, %s21, 1
      %p287 = scmp.lt.s32.totalorder %s284, 7
      %s288 = scalar_select %p287, %s284, 7
      %s289 = smul.addr %s286, 192
      %s290 = sadd.s32 %s288, %s289
      %s291 = smul.addr %s290, 8
      %s292 = scalar_lea.vmem %s0, %s291
      %s293 = smul.u32 8, %s22
      %s294 = smul.u32 8, %s22
      %p295 = scmp.lt.s32.totalorder %s21, 1
      %s296 = scalar_select %p295, %s21, 1
      %p297 = scmp.lt.s32.totalorder %s294, 7
      %s298 = scalar_select %p297, %s294, 7
      %s299 = smul.addr %s296, 192
      %s300 = sadd.s32 %s298, %s299
      %s301 = smul.addr %s300, 8
      %s302 = scalar_lea.vmem %s1, %s301
      %s303 = smul.u32 8, %s22
      %s304 = smul.u32 8, %s22
      %p305 = scmp.lt.s32.totalorder %s21, 1
      %s306 = scalar_select %p305, %s21, 1
      %p307 = scmp.lt.s32.totalorder %s304, 7
      %s308 = scalar_select %p307, %s304, 7
      %s309 = smul.addr %s306, 32
      %s310 = sadd.s32 %s308, %s309
      %s311 = smul.addr %s310, 8
      %s312 = scalar_lea.vmem %s4, %s311
      %s313 = smul.u32 8, %s22
      %s314 = smul.u32 8, %s22
      %p315 = scmp.lt.s32.totalorder %s21, 1
      %s316 = scalar_select %p315, %s21, 1
      %p317 = scmp.lt.s32.totalorder %s314, 7
      %s318 = scalar_select %p317, %s314, 7
      %s319 = smul.addr %s316, 32
      %s320 = sadd.s32 %s318, %s319
      %s321 = smul.addr %s320, 8
      %s322 = scalar_lea.vmem %s5, %s321
      %s323 = smul.u32 8, %s22
      %v324 = vld [vmem:[%s292] sm:$0xff]
      %v325 = vld [vmem:[%s292 + $0x8] sm:$0xff]
      %v326 = vld [vmem:[%s292 + $0x10] sm:$0xff]
      %v327 = vld [vmem:[%s292 + $0x18] sm:$0xff]
      %v328 = vld [vmem:[%s292 + $0x20] sm:$0xff]
      %v329 = vld [vmem:[%s292 + $0x28] sm:$0xff]
      %v330 = vld [vmem:[%s292 + $0x30] sm:$0xff]
      %v331 = vld [vmem:[%s292 + $0x38] sm:$0xff]
      %v332 = vld [vmem:[%s292 + $0x40] sm:$0xff]
      %v333 = vld [vmem:[%s292 + $0x48] sm:$0xff]
      %v334 = vld [vmem:[%s292 + $0x50] sm:$0xff]
      %v335 = vld [vmem:[%s292 + $0x58] sm:$0xff]
      %v336 = vld [vmem:[%s292 + $0x60] sm:$0xff]
      %v337 = vld [vmem:[%s292 + $0x68] sm:$0xff]
      %v338 = vld [vmem:[%s292 + $0x70] sm:$0xff]
      %v339 = vld [vmem:[%s292 + $0x78] sm:$0xff]
      %v340 = vld [vmem:[%s292 + $0x80] sm:$0xff]
      %v341 = vld [vmem:[%s292 + $0x88] sm:$0xff]
      %v342 = vld [vmem:[%s292 + $0x90] sm:$0xff]
      %v343 = vld [vmem:[%s292 + $0x98] sm:$0xff]
      %v344 = vld [vmem:[%s292 + $0xa0] sm:$0xff]
      %v345 = vld [vmem:[%s292 + $0xa8] sm:$0xff]
      %v346 = vld [vmem:[%s292 + $0xb0] sm:$0xff]
      %v347 = vld [vmem:[%s292 + $0xb8] sm:$0xff]
      %v348 = vld [vmem:[%s292 + $0xc0] sm:$0xff]
      %v349 = vld [vmem:[%s292 + $0xc8] sm:$0xff]
      %v350 = vld [vmem:[%s292 + $0xd0] sm:$0xff]
      %v351 = vld [vmem:[%s292 + $0xd8] sm:$0xff]
      %v352 = vld [vmem:[%s292 + $0xe0] sm:$0xff]
      %v353 = vld [vmem:[%s292 + $0xe8] sm:$0xff]
      %v354 = vld [vmem:[%s292 + $0xf0] sm:$0xff]
      %v355 = vld [vmem:[%s292 + $0xf8] sm:$0xff]
      %v356 = vld [vmem:[%s292 + $0x100] sm:$0xff]
      %v357 = vld [vmem:[%s292 + $0x108] sm:$0xff]
      %v358 = vld [vmem:[%s292 + $0x110] sm:$0xff]
      %v359 = vld [vmem:[%s292 + $0x118] sm:$0xff]
      %v360 = vld [vmem:[%s292 + $0x120] sm:$0xff]
      %v361 = vld [vmem:[%s292 + $0x128] sm:$0xff]
      %v362 = vld [vmem:[%s292 + $0x130] sm:$0xff]
      %v363 = vld [vmem:[%s292 + $0x138] sm:$0xff]
      %v364 = vld [vmem:[%s292 + $0x140] sm:$0xff]
      %v365 = vld [vmem:[%s292 + $0x148] sm:$0xff]
      %v366 = vld [vmem:[%s292 + $0x150] sm:$0xff]
      %v367 = vld [vmem:[%s292 + $0x158] sm:$0xff]
      %v368 = vld [vmem:[%s292 + $0x160] sm:$0xff]
      %v369 = vld [vmem:[%s292 + $0x168] sm:$0xff]
      %v370 = vld [vmem:[%s292 + $0x170] sm:$0xff]
      %v371 = vld [vmem:[%s292 + $0x178] sm:$0xff]
      %v372 = vld [vmem:[%s292 + $0x180] sm:$0xff]
      %v373 = vld [vmem:[%s292 + $0x188] sm:$0xff]
      %v374 = vld [vmem:[%s292 + $0x190] sm:$0xff]
      %v375 = vld [vmem:[%s292 + $0x198] sm:$0xff]
      %v376 = vld [vmem:[%s292 + $0x1a0] sm:$0xff]
      %v377 = vld [vmem:[%s292 + $0x1a8] sm:$0xff]
      %v378 = vld [vmem:[%s292 + $0x1b0] sm:$0xff]
      %v379 = vld [vmem:[%s292 + $0x1b8] sm:$0xff]
      %v380 = vld [vmem:[%s292 + $0x1c0] sm:$0xff]
      %v381 = vld [vmem:[%s292 + $0x1c8] sm:$0xff]
      %v382 = vld [vmem:[%s292 + $0x1d0] sm:$0xff]
      %v383 = vld [vmem:[%s292 + $0x1d8] sm:$0xff]
      %v384 = vld [vmem:[%s292 + $0x1e0] sm:$0xff]
      %v385 = vld [vmem:[%s292 + $0x1e8] sm:$0xff]
      %v386 = vld [vmem:[%s292 + $0x1f0] sm:$0xff]
      %v387 = vld [vmem:[%s292 + $0x1f8] sm:$0xff]
      %v388 = vld [vmem:[%s292 + $0x200] sm:$0xff]
      %v389 = vld [vmem:[%s292 + $0x208] sm:$0xff]
      %v390 = vld [vmem:[%s292 + $0x210] sm:$0xff]
      %v391 = vld [vmem:[%s292 + $0x218] sm:$0xff]
      %v392 = vld [vmem:[%s292 + $0x220] sm:$0xff]
      %v393 = vld [vmem:[%s292 + $0x228] sm:$0xff]
      %v394 = vld [vmem:[%s292 + $0x230] sm:$0xff]
      %v395 = vld [vmem:[%s292 + $0x238] sm:$0xff]
      %v396 = vld [vmem:[%s292 + $0x240] sm:$0xff]
      %v397 = vld [vmem:[%s292 + $0x248] sm:$0xff]
      %v398 = vld [vmem:[%s292 + $0x250] sm:$0xff]
      %v399 = vld [vmem:[%s292 + $0x258] sm:$0xff]
      %v400 = vld [vmem:[%s292 + $0x260] sm:$0xff]
      %v401 = vld [vmem:[%s292 + $0x268] sm:$0xff]
      %v402 = vld [vmem:[%s292 + $0x270] sm:$0xff]
      %v403 = vld [vmem:[%s292 + $0x278] sm:$0xff]
      %v404 = vld [vmem:[%s292 + $0x280] sm:$0xff]
      %v405 = vld [vmem:[%s292 + $0x288] sm:$0xff]
      %v406 = vld [vmem:[%s292 + $0x290] sm:$0xff]
      %v407 = vld [vmem:[%s292 + $0x298] sm:$0xff]
      %v408 = vld [vmem:[%s292 + $0x2a0] sm:$0xff]
      %v409 = vld [vmem:[%s292 + $0x2a8] sm:$0xff]
      %v410 = vld [vmem:[%s292 + $0x2b0] sm:$0xff]
      %v411 = vld [vmem:[%s292 + $0x2b8] sm:$0xff]
      %v412 = vld [vmem:[%s292 + $0x2c0] sm:$0xff]
      %v413 = vld [vmem:[%s292 + $0x2c8] sm:$0xff]
      %v414 = vld [vmem:[%s292 + $0x2d0] sm:$0xff]
      %v415 = vld [vmem:[%s292 + $0x2d8] sm:$0xff]
      %v416 = vld [vmem:[%s292 + $0x2e0] sm:$0xff]
      %v417 = vld [vmem:[%s292 + $0x2e8] sm:$0xff]
      %v418 = vld [vmem:[%s292 + $0x2f0] sm:$0xff]
      %v419 = vld [vmem:[%s292 + $0x2f8] sm:$0xff]
      %v420 = vld [vmem:[%s292 + $0x300] sm:$0xff]
      %v421 = vld [vmem:[%s292 + $0x308] sm:$0xff]
      %v422 = vld [vmem:[%s292 + $0x310] sm:$0xff]
      %v423 = vld [vmem:[%s292 + $0x318] sm:$0xff]
      %v424 = vld [vmem:[%s292 + $0x320] sm:$0xff]
      %v425 = vld [vmem:[%s292 + $0x328] sm:$0xff]
      %v426 = vld [vmem:[%s292 + $0x330] sm:$0xff]
      %v427 = vld [vmem:[%s292 + $0x338] sm:$0xff]
      %v428 = vld [vmem:[%s292 + $0x340] sm:$0xff]
      %v429 = vld [vmem:[%s292 + $0x348] sm:$0xff]
      %v430 = vld [vmem:[%s292 + $0x350] sm:$0xff]
      %v431 = vld [vmem:[%s292 + $0x358] sm:$0xff]
      %v432 = vld [vmem:[%s292 + $0x360] sm:$0xff]
      %v433 = vld [vmem:[%s292 + $0x368] sm:$0xff]
      %v434 = vld [vmem:[%s292 + $0x370] sm:$0xff]
      %v435 = vld [vmem:[%s292 + $0x378] sm:$0xff]
      %v436 = vld [vmem:[%s292 + $0x380] sm:$0xff]
      %v437 = vld [vmem:[%s292 + $0x388] sm:$0xff]
      %v438 = vld [vmem:[%s292 + $0x390] sm:$0xff]
      %v439 = vld [vmem:[%s292 + $0x398] sm:$0xff]
      %v440 = vld [vmem:[%s292 + $0x3a0] sm:$0xff]
      %v441 = vld [vmem:[%s292 + $0x3a8] sm:$0xff]
      %v442 = vld [vmem:[%s292 + $0x3b0] sm:$0xff]
      %v443 = vld [vmem:[%s292 + $0x3b8] sm:$0xff]
      %v444 = vld [vmem:[%s292 + $0x3c0] sm:$0xff]
      %v445 = vld [vmem:[%s292 + $0x3c8] sm:$0xff]
      %v446 = vld [vmem:[%s292 + $0x3d0] sm:$0xff]
      %v447 = vld [vmem:[%s292 + $0x3d8] sm:$0xff]
      %v448 = vld [vmem:[%s292 + $0x3e0] sm:$0xff]
      %v449 = vld [vmem:[%s292 + $0x3e8] sm:$0xff]
      %v450 = vld [vmem:[%s292 + $0x3f0] sm:$0xff]
      %v451 = vld [vmem:[%s292 + $0x3f8] sm:$0xff]
      %v452 = vld [vmem:[%s292 + $0x400] sm:$0xff]
      %v453 = vld [vmem:[%s292 + $0x408] sm:$0xff]
      %v454 = vld [vmem:[%s292 + $0x410] sm:$0xff]
      %v455 = vld [vmem:[%s292 + $0x418] sm:$0xff]
      %v456 = vld [vmem:[%s292 + $0x420] sm:$0xff]
      %v457 = vld [vmem:[%s292 + $0x428] sm:$0xff]
      %v458 = vld [vmem:[%s292 + $0x430] sm:$0xff]
      %v459 = vld [vmem:[%s292 + $0x438] sm:$0xff]
      %v460 = vld [vmem:[%s292 + $0x440] sm:$0xff]
      %v461 = vld [vmem:[%s292 + $0x448] sm:$0xff]
      %v462 = vld [vmem:[%s292 + $0x450] sm:$0xff]
      %v463 = vld [vmem:[%s292 + $0x458] sm:$0xff]
      %v464 = vld [vmem:[%s292 + $0x460] sm:$0xff]
      %v465 = vld [vmem:[%s292 + $0x468] sm:$0xff]
      %v466 = vld [vmem:[%s292 + $0x470] sm:$0xff]
      %v467 = vld [vmem:[%s292 + $0x478] sm:$0xff]
      %v468 = vld [vmem:[%s292 + $0x480] sm:$0xff]
      %v469 = vld [vmem:[%s292 + $0x488] sm:$0xff]
      %v470 = vld [vmem:[%s292 + $0x490] sm:$0xff]
      %v471 = vld [vmem:[%s292 + $0x498] sm:$0xff]
      %v472 = vld [vmem:[%s292 + $0x4a0] sm:$0xff]
      %v473 = vld [vmem:[%s292 + $0x4a8] sm:$0xff]
      %v474 = vld [vmem:[%s292 + $0x4b0] sm:$0xff]
      %v475 = vld [vmem:[%s292 + $0x4b8] sm:$0xff]
      %v476 = vld [vmem:[%s292 + $0x4c0] sm:$0xff]
      %v477 = vld [vmem:[%s292 + $0x4c8] sm:$0xff]
      %v478 = vld [vmem:[%s292 + $0x4d0] sm:$0xff]
      %v479 = vld [vmem:[%s292 + $0x4d8] sm:$0xff]
      %v480 = vld [vmem:[%s292 + $0x4e0] sm:$0xff]
      %v481 = vld [vmem:[%s292 + $0x4e8] sm:$0xff]
      %v482 = vld [vmem:[%s292 + $0x4f0] sm:$0xff]
      %v483 = vld [vmem:[%s292 + $0x4f8] sm:$0xff]
      %v484 = vld [vmem:[%s292 + $0x500] sm:$0xff]
      %v485 = vld [vmem:[%s292 + $0x508] sm:$0xff]
      %v486 = vld [vmem:[%s292 + $0x510] sm:$0xff]
      %v487 = vld [vmem:[%s292 + $0x518] sm:$0xff]
      %v488 = vld [vmem:[%s292 + $0x520] sm:$0xff]
      %v489 = vld [vmem:[%s292 + $0x528] sm:$0xff]
      %v490 = vld [vmem:[%s292 + $0x530] sm:$0xff]
      %v491 = vld [vmem:[%s292 + $0x538] sm:$0xff]
      %v492 = vld [vmem:[%s292 + $0x540] sm:$0xff]
      %v493 = vld [vmem:[%s292 + $0x548] sm:$0xff]
      %v494 = vld [vmem:[%s292 + $0x550] sm:$0xff]
      %v495 = vld [vmem:[%s292 + $0x558] sm:$0xff]
      %v496 = vld [vmem:[%s292 + $0x560] sm:$0xff]
      %v497 = vld [vmem:[%s292 + $0x568] sm:$0xff]
      %v498 = vld [vmem:[%s292 + $0x570] sm:$0xff]
      %v499 = vld [vmem:[%s292 + $0x578] sm:$0xff]
      %v500 = vld [vmem:[%s292 + $0x580] sm:$0xff]
      %v501 = vld [vmem:[%s292 + $0x588] sm:$0xff]
      %v502 = vld [vmem:[%s292 + $0x590] sm:$0xff]
      %v503 = vld [vmem:[%s292 + $0x598] sm:$0xff]
      %v504 = vld [vmem:[%s292 + $0x5a0] sm:$0xff]
      %v505 = vld [vmem:[%s292 + $0x5a8] sm:$0xff]
      %v506 = vld [vmem:[%s292 + $0x5b0] sm:$0xff]
      %v507 = vld [vmem:[%s292 + $0x5b8] sm:$0xff]
      %v508 = vld [vmem:[%s292 + $0x5c0] sm:$0xff]
      %v509 = vld [vmem:[%s292 + $0x5c8] sm:$0xff]
      %v510 = vld [vmem:[%s292 + $0x5d0] sm:$0xff]
      %v511 = vld [vmem:[%s292 + $0x5d8] sm:$0xff]
      %v512 = vld [vmem:[%s292 + $0x5e0] sm:$0xff]
      %v513 = vld [vmem:[%s292 + $0x5e8] sm:$0xff]
      %v514 = vld [vmem:[%s292 + $0x5f0] sm:$0xff]
      %v515 = vld [vmem:[%s292 + $0x5f8] sm:$0xff]
      %v516 = vld [vmem:[%s302] sm:$0xff]
      %v517 = vld [vmem:[%s302 + $0x8] sm:$0xff]
      %v518 = vld [vmem:[%s302 + $0x10] sm:$0xff]
      %v519 = vld [vmem:[%s302 + $0x18] sm:$0xff]
      %v520 = vld [vmem:[%s302 + $0x20] sm:$0xff]
      %v521 = vld [vmem:[%s302 + $0x28] sm:$0xff]
      %v522 = vld [vmem:[%s302 + $0x30] sm:$0xff]
      %v523 = vld [vmem:[%s302 + $0x38] sm:$0xff]
      %v524 = vld [vmem:[%s302 + $0x40] sm:$0xff]
      %v525 = vld [vmem:[%s302 + $0x48] sm:$0xff]
      %v526 = vld [vmem:[%s302 + $0x50] sm:$0xff]
      %v527 = vld [vmem:[%s302 + $0x58] sm:$0xff]
      %v528 = vld [vmem:[%s302 + $0x60] sm:$0xff]
      %v529 = vld [vmem:[%s302 + $0x68] sm:$0xff]
      %v530 = vld [vmem:[%s302 + $0x70] sm:$0xff]
      %v531 = vld [vmem:[%s302 + $0x78] sm:$0xff]
      %v532 = vld [vmem:[%s302 + $0x80] sm:$0xff]
      %v533 = vld [vmem:[%s302 + $0x88] sm:$0xff]
      %v534 = vld [vmem:[%s302 + $0x90] sm:$0xff]
      %v535 = vld [vmem:[%s302 + $0x98] sm:$0xff]
      %v536 = vld [vmem:[%s302 + $0xa0] sm:$0xff]
      %v537 = vld [vmem:[%s302 + $0xa8] sm:$0xff]
      %v538 = vld [vmem:[%s302 + $0xb0] sm:$0xff]
      %v539 = vld [vmem:[%s302 + $0xb8] sm:$0xff]
      %v540 = vld [vmem:[%s302 + $0xc0] sm:$0xff]
      %v541 = vld [vmem:[%s302 + $0xc8] sm:$0xff]
      %v542 = vld [vmem:[%s302 + $0xd0] sm:$0xff]
      %v543 = vld [vmem:[%s302 + $0xd8] sm:$0xff]
      %v544 = vld [vmem:[%s302 + $0xe0] sm:$0xff]
      %v545 = vld [vmem:[%s302 + $0xe8] sm:$0xff]
      %v546 = vld [vmem:[%s302 + $0xf0] sm:$0xff]
      %v547 = vld [vmem:[%s302 + $0xf8] sm:$0xff]
      %v548 = vld [vmem:[%s302 + $0x100] sm:$0xff]
      %v549 = vld [vmem:[%s302 + $0x108] sm:$0xff]
      %v550 = vld [vmem:[%s302 + $0x110] sm:$0xff]
      %v551 = vld [vmem:[%s302 + $0x118] sm:$0xff]
      %v552 = vld [vmem:[%s302 + $0x120] sm:$0xff]
      %v553 = vld [vmem:[%s302 + $0x128] sm:$0xff]
      %v554 = vld [vmem:[%s302 + $0x130] sm:$0xff]
      %v555 = vld [vmem:[%s302 + $0x138] sm:$0xff]
      %v556 = vld [vmem:[%s302 + $0x140] sm:$0xff]
      %v557 = vld [vmem:[%s302 + $0x148] sm:$0xff]
      %v558 = vld [vmem:[%s302 + $0x150] sm:$0xff]
      %v559 = vld [vmem:[%s302 + $0x158] sm:$0xff]
      %v560 = vld [vmem:[%s302 + $0x160] sm:$0xff]
      %v561 = vld [vmem:[%s302 + $0x168] sm:$0xff]
      %v562 = vld [vmem:[%s302 + $0x170] sm:$0xff]
      %v563 = vld [vmem:[%s302 + $0x178] sm:$0xff]
      %v564 = vld [vmem:[%s302 + $0x180] sm:$0xff]
      %v565 = vld [vmem:[%s302 + $0x188] sm:$0xff]
      %v566 = vld [vmem:[%s302 + $0x190] sm:$0xff]
      %v567 = vld [vmem:[%s302 + $0x198] sm:$0xff]
      %v568 = vld [vmem:[%s302 + $0x1a0] sm:$0xff]
      %v569 = vld [vmem:[%s302 + $0x1a8] sm:$0xff]
      %v570 = vld [vmem:[%s302 + $0x1b0] sm:$0xff]
      %v571 = vld [vmem:[%s302 + $0x1b8] sm:$0xff]
      %v572 = vld [vmem:[%s302 + $0x1c0] sm:$0xff]
      %v573 = vld [vmem:[%s302 + $0x1c8] sm:$0xff]
      %v574 = vld [vmem:[%s302 + $0x1d0] sm:$0xff]
      %v575 = vld [vmem:[%s302 + $0x1d8] sm:$0xff]
      %v576 = vld [vmem:[%s302 + $0x1e0] sm:$0xff]
      %v577 = vld [vmem:[%s302 + $0x1e8] sm:$0xff]
      %v578 = vld [vmem:[%s302 + $0x1f0] sm:$0xff]
      %v579 = vld [vmem:[%s302 + $0x1f8] sm:$0xff]
      %v580 = vld [vmem:[%s302 + $0x200] sm:$0xff]
      %v581 = vld [vmem:[%s302 + $0x208] sm:$0xff]
      %v582 = vld [vmem:[%s302 + $0x210] sm:$0xff]
      %v583 = vld [vmem:[%s302 + $0x218] sm:$0xff]
      %v584 = vld [vmem:[%s302 + $0x220] sm:$0xff]
      %v585 = vld [vmem:[%s302 + $0x228] sm:$0xff]
      %v586 = vld [vmem:[%s302 + $0x230] sm:$0xff]
      %v587 = vld [vmem:[%s302 + $0x238] sm:$0xff]
      %v588 = vld [vmem:[%s302 + $0x240] sm:$0xff]
      %v589 = vld [vmem:[%s302 + $0x248] sm:$0xff]
      %v590 = vld [vmem:[%s302 + $0x250] sm:$0xff]
      %v591 = vld [vmem:[%s302 + $0x258] sm:$0xff]
      %v592 = vld [vmem:[%s302 + $0x260] sm:$0xff]
      %v593 = vld [vmem:[%s302 + $0x268] sm:$0xff]
      %v594 = vld [vmem:[%s302 + $0x270] sm:$0xff]
      %v595 = vld [vmem:[%s302 + $0x278] sm:$0xff]
      %v596 = vld [vmem:[%s302 + $0x280] sm:$0xff]
      %v597 = vld [vmem:[%s302 + $0x288] sm:$0xff]
      %v598 = vld [vmem:[%s302 + $0x290] sm:$0xff]
      %v599 = vld [vmem:[%s302 + $0x298] sm:$0xff]
      %v600 = vld [vmem:[%s302 + $0x2a0] sm:$0xff]
      %v601 = vld [vmem:[%s302 + $0x2a8] sm:$0xff]
      %v602 = vld [vmem:[%s302 + $0x2b0] sm:$0xff]
      %v603 = vld [vmem:[%s302 + $0x2b8] sm:$0xff]
      %v604 = vld [vmem:[%s302 + $0x2c0] sm:$0xff]
      %v605 = vld [vmem:[%s302 + $0x2c8] sm:$0xff]
      %v606 = vld [vmem:[%s302 + $0x2d0] sm:$0xff]
      %v607 = vld [vmem:[%s302 + $0x2d8] sm:$0xff]
      %v608 = vld [vmem:[%s302 + $0x2e0] sm:$0xff]
      %v609 = vld [vmem:[%s302 + $0x2e8] sm:$0xff]
      %v610 = vld [vmem:[%s302 + $0x2f0] sm:$0xff]
      %v611 = vld [vmem:[%s302 + $0x2f8] sm:$0xff]
      %v612 = vld [vmem:[%s302 + $0x300] sm:$0xff]
      %v613 = vld [vmem:[%s302 + $0x308] sm:$0xff]
      %v614 = vld [vmem:[%s302 + $0x310] sm:$0xff]
      %v615 = vld [vmem:[%s302 + $0x318] sm:$0xff]
      %v616 = vld [vmem:[%s302 + $0x320] sm:$0xff]
      %v617 = vld [vmem:[%s302 + $0x328] sm:$0xff]
      %v618 = vld [vmem:[%s302 + $0x330] sm:$0xff]
      %v619 = vld [vmem:[%s302 + $0x338] sm:$0xff]
      %v620 = vld [vmem:[%s302 + $0x340] sm:$0xff]
      %v621 = vld [vmem:[%s302 + $0x348] sm:$0xff]
      %v622 = vld [vmem:[%s302 + $0x350] sm:$0xff]
      %v623 = vld [vmem:[%s302 + $0x358] sm:$0xff]
      %v624 = vld [vmem:[%s302 + $0x360] sm:$0xff]
      %v625 = vld [vmem:[%s302 + $0x368] sm:$0xff]
      %v626 = vld [vmem:[%s302 + $0x370] sm:$0xff]
      %v627 = vld [vmem:[%s302 + $0x378] sm:$0xff]
      %v628 = vld [vmem:[%s302 + $0x380] sm:$0xff]
      %v629 = vld [vmem:[%s302 + $0x388] sm:$0xff]
      %v630 = vld [vmem:[%s302 + $0x390] sm:$0xff]
      %v631 = vld [vmem:[%s302 + $0x398] sm:$0xff]
      %v632 = vld [vmem:[%s302 + $0x3a0] sm:$0xff]
      %v633 = vld [vmem:[%s302 + $0x3a8] sm:$0xff]
      %v634 = vld [vmem:[%s302 + $0x3b0] sm:$0xff]
      %v635 = vld [vmem:[%s302 + $0x3b8] sm:$0xff]
      %v636 = vld [vmem:[%s302 + $0x3c0] sm:$0xff]
      %v637 = vld [vmem:[%s302 + $0x3c8] sm:$0xff]
      %v638 = vld [vmem:[%s302 + $0x3d0] sm:$0xff]
      %v639 = vld [vmem:[%s302 + $0x3d8] sm:$0xff]
      %v640 = vld [vmem:[%s302 + $0x3e0] sm:$0xff]
      %v641 = vld [vmem:[%s302 + $0x3e8] sm:$0xff]
      %v642 = vld [vmem:[%s302 + $0x3f0] sm:$0xff]
      %v643 = vld [vmem:[%s302 + $0x3f8] sm:$0xff]
      %v644 = vld [vmem:[%s302 + $0x400] sm:$0xff]
      %v645 = vld [vmem:[%s302 + $0x408] sm:$0xff]
      %v646 = vld [vmem:[%s302 + $0x410] sm:$0xff]
      %v647 = vld [vmem:[%s302 + $0x418] sm:$0xff]
      %v648 = vld [vmem:[%s302 + $0x420] sm:$0xff]
      %v649 = vld [vmem:[%s302 + $0x428] sm:$0xff]
      %v650 = vld [vmem:[%s302 + $0x430] sm:$0xff]
      %v651 = vld [vmem:[%s302 + $0x438] sm:$0xff]
      %v652 = vld [vmem:[%s302 + $0x440] sm:$0xff]
      %v653 = vld [vmem:[%s302 + $0x448] sm:$0xff]
      %v654 = vld [vmem:[%s302 + $0x450] sm:$0xff]
      %v655 = vld [vmem:[%s302 + $0x458] sm:$0xff]
      %v656 = vld [vmem:[%s302 + $0x460] sm:$0xff]
      %v657 = vld [vmem:[%s302 + $0x468] sm:$0xff]
      %v658 = vld [vmem:[%s302 + $0x470] sm:$0xff]
      %v659 = vld [vmem:[%s302 + $0x478] sm:$0xff]
      %v660 = vld [vmem:[%s302 + $0x480] sm:$0xff]
      %v661 = vld [vmem:[%s302 + $0x488] sm:$0xff]
      %v662 = vld [vmem:[%s302 + $0x490] sm:$0xff]
      %v663 = vld [vmem:[%s302 + $0x498] sm:$0xff]
      %v664 = vld [vmem:[%s302 + $0x4a0] sm:$0xff]
      %v665 = vld [vmem:[%s302 + $0x4a8] sm:$0xff]
      %v666 = vld [vmem:[%s302 + $0x4b0] sm:$0xff]
      %v667 = vld [vmem:[%s302 + $0x4b8] sm:$0xff]
      %v668 = vld [vmem:[%s302 + $0x4c0] sm:$0xff]
      %v669 = vld [vmem:[%s302 + $0x4c8] sm:$0xff]
      %v670 = vld [vmem:[%s302 + $0x4d0] sm:$0xff]
      %v671 = vld [vmem:[%s302 + $0x4d8] sm:$0xff]
      %v672 = vld [vmem:[%s302 + $0x4e0] sm:$0xff]
      %v673 = vld [vmem:[%s302 + $0x4e8] sm:$0xff]
      %v674 = vld [vmem:[%s302 + $0x4f0] sm:$0xff]
      %v675 = vld [vmem:[%s302 + $0x4f8] sm:$0xff]
      %v676 = vld [vmem:[%s302 + $0x500] sm:$0xff]
      %v677 = vld [vmem:[%s302 + $0x508] sm:$0xff]
      %v678 = vld [vmem:[%s302 + $0x510] sm:$0xff]
      %v679 = vld [vmem:[%s302 + $0x518] sm:$0xff]
      %v680 = vld [vmem:[%s302 + $0x520] sm:$0xff]
      %v681 = vld [vmem:[%s302 + $0x528] sm:$0xff]
      %v682 = vld [vmem:[%s302 + $0x530] sm:$0xff]
      %v683 = vld [vmem:[%s302 + $0x538] sm:$0xff]
      %v684 = vld [vmem:[%s302 + $0x540] sm:$0xff]
      %v685 = vld [vmem:[%s302 + $0x548] sm:$0xff]
      %v686 = vld [vmem:[%s302 + $0x550] sm:$0xff]
      %v687 = vld [vmem:[%s302 + $0x558] sm:$0xff]
      %v688 = vld [vmem:[%s302 + $0x560] sm:$0xff]
      %v689 = vld [vmem:[%s302 + $0x568] sm:$0xff]
      %v690 = vld [vmem:[%s302 + $0x570] sm:$0xff]
      %v691 = vld [vmem:[%s302 + $0x578] sm:$0xff]
      %v692 = vld [vmem:[%s302 + $0x580] sm:$0xff]
      %v693 = vld [vmem:[%s302 + $0x588] sm:$0xff]
      %v694 = vld [vmem:[%s302 + $0x590] sm:$0xff]
      %v695 = vld [vmem:[%s302 + $0x598] sm:$0xff]
      %v696 = vld [vmem:[%s302 + $0x5a0] sm:$0xff]
      %v697 = vld [vmem:[%s302 + $0x5a8] sm:$0xff]
      %v698 = vld [vmem:[%s302 + $0x5b0] sm:$0xff]
      %v699 = vld [vmem:[%s302 + $0x5b8] sm:$0xff]
      %v700 = vld [vmem:[%s302 + $0x5c0] sm:$0xff]
      %v701 = vld [vmem:[%s302 + $0x5c8] sm:$0xff]
      %v702 = vld [vmem:[%s302 + $0x5d0] sm:$0xff]
      %v703 = vld [vmem:[%s302 + $0x5d8] sm:$0xff]
      %v704 = vld [vmem:[%s302 + $0x5e0] sm:$0xff]
      %v705 = vld [vmem:[%s302 + $0x5e8] sm:$0xff]
      %v706 = vld [vmem:[%s302 + $0x5f0] sm:$0xff]
      %v707 = vld [vmem:[%s302 + $0x5f8] sm:$0xff]
      %v708 = vld [vmem:[%s2] sm:$0xff]
      %v709 = vld [vmem:[%s2 + $0x8] sm:$0xff]
      %v710 = vld [vmem:[%s2 + $0x10] sm:$0xff]
      %v711 = vld [vmem:[%s2 + $0x18] sm:$0xff]
      %v712 = vld [vmem:[%s2 + $0x20] sm:$0xff]
      %v713 = vld [vmem:[%s2 + $0x28] sm:$0xff]
      %v714 = vld [vmem:[%s2 + $0x30] sm:$0xff]
      %v715 = vld [vmem:[%s2 + $0x38] sm:$0xff]
      %v716 = vld [vmem:[%s3] sm:$0xff]
      %v717 = vld [vmem:[%s3 + $0x8] sm:$0xff]
      %v718 = vld [vmem:[%s3 + $0x10] sm:$0xff]
      %v719 = vld [vmem:[%s3 + $0x18] sm:$0xff]
      %v720 = vmul.f32 %v324, %v516
      %v721 = vmul.f32 %v325, %v517
      %v722 = vmul.f32 %v326, %v518
      %v723 = vmul.f32 %v327, %v519
      %v724 = vmul.f32 %v328, %v520
      %v725 = vmul.f32 %v329, %v521
      %v726 = vmul.f32 %v330, %v522
      %v727 = vmul.f32 %v331, %v523
      %v728 = vmul.f32 %v332, %v524
      %v729 = vmul.f32 %v333, %v525
      %v730 = vmul.f32 %v334, %v526
      %v731 = vmul.f32 %v335, %v527
      %v732 = vmul.f32 %v336, %v528
      %v733 = vmul.f32 %v337, %v529
      %v734 = vmul.f32 %v338, %v530
      %v735 = vmul.f32 %v339, %v531
      %v736 = vmul.f32 %v340, %v532
      %v737 = vmul.f32 %v341, %v533
      %v738 = vmul.f32 %v342, %v534
      %v739 = vmul.f32 %v343, %v535
      %v740 = vmul.f32 %v344, %v536
      %v741 = vmul.f32 %v345, %v537
      %v742 = vmul.f32 %v346, %v538
      %v743 = vmul.f32 %v347, %v539
      %v744 = vmul.f32 %v348, %v540
      %v745 = vmul.f32 %v349, %v541
      %v746 = vmul.f32 %v350, %v542
      %v747 = vmul.f32 %v351, %v543
      %v748 = vmul.f32 %v352, %v544
      %v749 = vmul.f32 %v353, %v545
      %v750 = vmul.f32 %v354, %v546
      %v751 = vmul.f32 %v355, %v547
      %v752 = vmul.f32 %v356, %v548
      %v753 = vmul.f32 %v357, %v549
      %v754 = vmul.f32 %v358, %v550
      %v755 = vmul.f32 %v359, %v551
      %v756 = vmul.f32 %v360, %v552
      %v757 = vmul.f32 %v361, %v553
      %v758 = vmul.f32 %v362, %v554
      %v759 = vmul.f32 %v363, %v555
      %v760 = vmul.f32 %v364, %v556
      %v761 = vmul.f32 %v365, %v557
      %v762 = vmul.f32 %v366, %v558
      %v763 = vmul.f32 %v367, %v559
      %v764 = vmul.f32 %v368, %v560
      %v765 = vmul.f32 %v369, %v561
      %v766 = vmul.f32 %v370, %v562
      %v767 = vmul.f32 %v371, %v563
      %v768 = vmul.f32 %v372, %v564
      %v769 = vmul.f32 %v373, %v565
      %v770 = vmul.f32 %v374, %v566
      %v771 = vmul.f32 %v375, %v567
      %v772 = vmul.f32 %v376, %v568
      %v773 = vmul.f32 %v377, %v569
      %v774 = vmul.f32 %v378, %v570
      %v775 = vmul.f32 %v379, %v571
      %v776 = vmul.f32 %v380, %v572
      %v777 = vmul.f32 %v381, %v573
      %v778 = vmul.f32 %v382, %v574
      %v779 = vmul.f32 %v383, %v575
      %v780 = vmul.f32 %v384, %v576
      %v781 = vmul.f32 %v385, %v577
      %v782 = vmul.f32 %v386, %v578
      %v783 = vmul.f32 %v387, %v579
      %v784 = vmul.f32 %v388, %v580
      %v785 = vmul.f32 %v389, %v581
      %v786 = vmul.f32 %v390, %v582
      %v787 = vmul.f32 %v391, %v583
      %v788 = vmul.f32 %v392, %v584
      %v789 = vmul.f32 %v393, %v585
      %v790 = vmul.f32 %v394, %v586
      %v791 = vmul.f32 %v395, %v587
      %v792 = vmul.f32 %v396, %v588
      %v793 = vmul.f32 %v397, %v589
      %v794 = vmul.f32 %v398, %v590
      %v795 = vmul.f32 %v399, %v591
      %v796 = vmul.f32 %v400, %v592
      %v797 = vmul.f32 %v401, %v593
      %v798 = vmul.f32 %v402, %v594
      %v799 = vmul.f32 %v403, %v595
      %v800 = vmul.f32 %v404, %v596
      %v801 = vmul.f32 %v405, %v597
      %v802 = vmul.f32 %v406, %v598
      %v803 = vmul.f32 %v407, %v599
      %v804 = vmul.f32 %v408, %v600
      %v805 = vmul.f32 %v409, %v601
      %v806 = vmul.f32 %v410, %v602
      %v807 = vmul.f32 %v411, %v603
      %v808 = vmul.f32 %v412, %v604
      %v809 = vmul.f32 %v413, %v605
      %v810 = vmul.f32 %v414, %v606
      %v811 = vmul.f32 %v415, %v607
      %v812 = vmul.f32 %v416, %v608
      %v813 = vmul.f32 %v417, %v609
      %v814 = vmul.f32 %v418, %v610
      %v815 = vmul.f32 %v419, %v611
      %v816 = vmul.f32 %v420, %v612
      %v817 = vmul.f32 %v421, %v613
      %v818 = vmul.f32 %v422, %v614
      %v819 = vmul.f32 %v423, %v615
      %v820 = vmul.f32 %v424, %v616
      %v821 = vmul.f32 %v425, %v617
      %v822 = vmul.f32 %v426, %v618
      %v823 = vmul.f32 %v427, %v619
      %v824 = vmul.f32 %v428, %v620
      %v825 = vmul.f32 %v429, %v621
      %v826 = vmul.f32 %v430, %v622
      %v827 = vmul.f32 %v431, %v623
      %v828 = vmul.f32 %v432, %v624
      %v829 = vmul.f32 %v433, %v625
      %v830 = vmul.f32 %v434, %v626
      %v831 = vmul.f32 %v435, %v627
      %v832 = vmul.f32 %v436, %v628
      %v833 = vmul.f32 %v437, %v629
      %v834 = vmul.f32 %v438, %v630
      %v835 = vmul.f32 %v439, %v631
      %v836 = vmul.f32 %v440, %v632
      %v837 = vmul.f32 %v441, %v633
      %v838 = vmul.f32 %v442, %v634
      %v839 = vmul.f32 %v443, %v635
      %v840 = vmul.f32 %v444, %v636
      %v841 = vmul.f32 %v445, %v637
      %v842 = vmul.f32 %v446, %v638
      %v843 = vmul.f32 %v447, %v639
      %v844 = vmul.f32 %v448, %v640
      %v845 = vmul.f32 %v449, %v641
      %v846 = vmul.f32 %v450, %v642
      %v847 = vmul.f32 %v451, %v643
      %v848 = vmul.f32 %v452, %v644
      %v849 = vmul.f32 %v453, %v645
      %v850 = vmul.f32 %v454, %v646
      %v851 = vmul.f32 %v455, %v647
      %v852 = vmul.f32 %v456, %v648
      %v853 = vmul.f32 %v457, %v649
      %v854 = vmul.f32 %v458, %v650
      %v855 = vmul.f32 %v459, %v651
      %v856 = vmul.f32 %v460, %v652
      %v857 = vmul.f32 %v461, %v653
      %v858 = vmul.f32 %v462, %v654
      %v859 = vmul.f32 %v463, %v655
      %v860 = vmul.f32 %v464, %v656
      %v861 = vmul.f32 %v465, %v657
      %v862 = vmul.f32 %v466, %v658
      %v863 = vmul.f32 %v467, %v659
      %v864 = vmul.f32 %v468, %v660
      %v865 = vmul.f32 %v469, %v661
      %v866 = vmul.f32 %v470, %v662
      %v867 = vmul.f32 %v471, %v663
      %v868 = vmul.f32 %v472, %v664
      %v869 = vmul.f32 %v473, %v665
      %v870 = vmul.f32 %v474, %v666
      %v871 = vmul.f32 %v475, %v667
      %v872 = vmul.f32 %v476, %v668
      %v873 = vmul.f32 %v477, %v669
      %v874 = vmul.f32 %v478, %v670
      %v875 = vmul.f32 %v479, %v671
      %v876 = vmul.f32 %v480, %v672
      %v877 = vmul.f32 %v481, %v673
      %v878 = vmul.f32 %v482, %v674
      %v879 = vmul.f32 %v483, %v675
      %v880 = vmul.f32 %v484, %v676
      %v881 = vmul.f32 %v485, %v677
      %v882 = vmul.f32 %v486, %v678
      %v883 = vmul.f32 %v487, %v679
      %v884 = vmul.f32 %v488, %v680
      %v885 = vmul.f32 %v489, %v681
      %v886 = vmul.f32 %v490, %v682
      %v887 = vmul.f32 %v491, %v683
      %v888 = vmul.f32 %v492, %v684
      %v889 = vmul.f32 %v493, %v685
      %v890 = vmul.f32 %v494, %v686
      %v891 = vmul.f32 %v495, %v687
      %v892 = vmul.f32 %v496, %v688
      %v893 = vmul.f32 %v497, %v689
      %v894 = vmul.f32 %v498, %v690
      %v895 = vmul.f32 %v499, %v691
      %v896 = vmul.f32 %v500, %v692
      %v897 = vmul.f32 %v501, %v693
      %v898 = vmul.f32 %v502, %v694
      %v899 = vmul.f32 %v503, %v695
      %v900 = vmul.f32 %v504, %v696
      %v901 = vmul.f32 %v505, %v697
      %v902 = vmul.f32 %v506, %v698
      %v903 = vmul.f32 %v507, %v699
      %v904 = vmul.f32 %v508, %v700
      %v905 = vmul.f32 %v509, %v701
      %v906 = vmul.f32 %v510, %v702
      %v907 = vmul.f32 %v511, %v703
      %v908 = vmul.f32 %v512, %v704
      %v909 = vmul.f32 %v513, %v705
      %v910 = vmul.f32 %v514, %v706
      %v911 = vmul.f32 %v515, %v707
      %vm912 = vcmask 523264
      %v914 = vsel %vm912, %v709, 0
      %v917 = vsel %vm912, %v711, 0
      %v920 = vsel %vm912, %v713, 0
      %v923 = vsel %vm912, %v715, 0
      %925 = vmatprep.subr.mxu0 %v841
      %926 = vmatpush1.msra.mxu0 %v840
      %927 = vmatprep.subr.mxu0 %v833
      %928 = vmatpush1.msra.mxu0 %v832
      %929 = vmatprep.subr.mxu0 %v825
      %930 = vmatpush1.msra.mxu0 %v824
      %931 = vmatprep.subr.mxu0 %v817
      %932 = vmatpush1.msra.mxu0 %v816
      %933 = vmatprep.subr.mxu0 %v809
      %934 = vmatpush1.msra.mxu0 %v808
      %935 = vmatprep.subr.mxu0 %v801
      %936 = vmatpush1.msra.mxu0 %v800
      %937 = vmatprep.subr.mxu0 %v793
      %938 = vmatpush1.msra.mxu0 %v792
      %939 = vmatprep.subr.mxu0 %v785
      %940 = vmatpush1.msra.mxu0 %v784
      %941 = vmatprep.subr.mxu0 %v777
      %942 = vmatpush1.msra.mxu0 %v776
      %943 = vmatprep.subr.mxu0 %v769
      %944 = vmatpush1.msra.mxu0 %v768
      %945 = vmatprep.subr.mxu0 %v761
      %946 = vmatpush1.msra.mxu0 %v760
      %947 = vmatprep.subr.mxu0 %v753
      %948 = vmatpush1.msra.mxu0 %v752
      %949 = vmatprep.subr.mxu0 %v745
      %950 = vmatpush1.msra.mxu0 %v744
      %951 = vmatprep.subr.mxu0 %v737
      %952 = vmatpush1.msra.mxu0 %v736
      %953 = vmatprep.subr.mxu0 %v729
      %954 = vmatpush1.msra.mxu0 %v728
      %955 = vmatprep.subr.mxu0 %v721
      %956 = vmatpush1.msra.mxu0 %v720
      %957 = vmatprep.subr.mxu0 0.0
      %958 = vmatpush2.msra.mxu0 0.0
      %959 = vmatprep.subr.mxu0 0.0
      %960 = vmatpush2.msra.mxu0 0.0
      %961 = vmatprep.subr.mxu0 0.0
      %962 = vmatpush2.msra.mxu0 0.0
      %963 = vmatprep.subr.mxu0 0.0
      %964 = vmatpush2.msra.mxu0 0.0
      %965 = vmatprep.subr.mxu0 0.0
      %966 = vmatpush2.msra.mxu0 0.0
      %967 = vmatprep.subr.mxu0 0.0
      %968 = vmatpush2.msra.mxu0 0.0
      %969 = vmatprep.subr.mxu0 0.0
      %970 = vmatpush2.msra.mxu0 0.0
      %971 = vmatprep.subr.mxu0 0.0
      %972 = vmatpush2.msra.mxu0 0.0
      %973 = vmatprep.subr.mxu0 %v905
      %974 = vmatpush2.msra.mxu0 %v904
      %975 = vmatprep.subr.mxu0 %v897
      %976 = vmatpush2.msra.mxu0 %v896
      %977 = vmatprep.subr.mxu0 %v889
      %978 = vmatpush2.msra.mxu0 %v888
      %979 = vmatprep.subr.mxu0 %v881
      %980 = vmatpush2.msra.mxu0 %v880
      %981 = vmatprep.subr.mxu0 %v873
      %982 = vmatpush2.msra.mxu0 %v872
      %983 = vmatprep.subr.mxu0 %v865
      %984 = vmatpush2.msra.mxu0 %v864
      %985 = vmatprep.subr.mxu0 %v857
      %986 = vmatpush2.msra.mxu0 %v856
      %987 = vmatprep.subr.mxu0 %v849
      %988 = vmatpush2.msra.mxu0 %v848
      %989 = vmatprep.mubr.f32.mxu0 %v914
      %990 = vmatmul.mubr.f32.gmra.mxu0 %v708
      %v991 = vpop.f32.mrf.mxu0
      %v992 = vadd.f32 0.0, %v991
      %v993 = vpop.f32.mrf.mxu0
      %v994 = vadd.f32 0.0, %v993
      %995 = vmatprep.mubr.f32.mxu0 %v917
      %996 = vmatmul.mubr.f32.gmra.mxu0 %v710
      %v997 = vpop.f32.mrf.mxu0
      %v998 = vadd.f32 0.0, %v997
      %v999 = vpop.f32.mrf.mxu0
      %v1000 = vadd.f32 0.0, %v999
      %1001 = vmatprep.mubr.f32.mxu0 %v920
      %1002 = vmatmul.mubr.f32.gmra.mxu0 %v712
      %v1003 = vpop.f32.mrf.mxu0
      %v1004 = vadd.f32 0.0, %v1003
      %v1005 = vpop.f32.mrf.mxu0
      %v1006 = vadd.f32 0.0, %v1005
      %1007 = vmatprep.mubr.f32.mxu0 %v923
      %1008 = vmatmul.mubr.f32.gmra.mxu0 %v714
      %v1009 = vpop.f32.mrf.mxu0
      %v1010 = vadd.f32 0.0, %v1009
      %v1011 = vpop.f32.mrf.mxu0
      %v1012 = vadd.f32 0.0, %v1011
      %1013 = vdwg.mxu0
      %1014 = vmatprep.subr.mxu0 %v843
      %1015 = vmatpush1.msra.mxu0 %v842
      %1016 = vmatprep.subr.mxu0 %v835
      %1017 = vmatpush1.msra.mxu0 %v834
      %1018 = vmatprep.subr.mxu0 %v827
      %1019 = vmatpush1.msra.mxu0 %v826
      %1020 = vmatprep.subr.mxu0 %v819
      %1021 = vmatpush1.msra.mxu0 %v818
      %1022 = vmatprep.subr.mxu0 %v811
      %1023 = vmatpush1.msra.mxu0 %v810
      %1024 = vmatprep.subr.mxu0 %v803
      %1025 = vmatpush1.msra.mxu0 %v802
      %1026 = vmatprep.subr.mxu0 %v795
      %1027 = vmatpush1.msra.mxu0 %v794
      %1028 = vmatprep.subr.mxu0 %v787
      %1029 = vmatpush1.msra.mxu0 %v786
      %1030 = vmatprep.subr.mxu0 %v779
      %1031 = vmatpush1.msra.mxu0 %v778
      %1032 = vmatprep.subr.mxu0 %v771
      %1033 = vmatpush1.msra.mxu0 %v770
      %1034 = vmatprep.subr.mxu0 %v763
      %1035 = vmatpush1.msra.mxu0 %v762
      %1036 = vmatprep.subr.mxu0 %v755
      %1037 = vmatpush1.msra.mxu0 %v754
      %1038 = vmatprep.subr.mxu0 %v747
      %1039 = vmatpush1.msra.mxu0 %v746
      %1040 = vmatprep.subr.mxu0 %v739
      %1041 = vmatpush1.msra.mxu0 %v738
      %1042 = vmatprep.subr.mxu0 %v731
      %1043 = vmatpush1.msra.mxu0 %v730
      %1044 = vmatprep.subr.mxu0 %v723
      %1045 = vmatpush1.msra.mxu0 %v722
      %1046 = vmatprep.subr.mxu0 0.0
      %1047 = vmatpush2.msra.mxu0 0.0
      %1048 = vmatprep.subr.mxu0 0.0
      %1049 = vmatpush2.msra.mxu0 0.0
      %1050 = vmatprep.subr.mxu0 0.0
      %1051 = vmatpush2.msra.mxu0 0.0
      %1052 = vmatprep.subr.mxu0 0.0
      %1053 = vmatpush2.msra.mxu0 0.0
      %1054 = vmatprep.subr.mxu0 0.0
      %1055 = vmatpush2.msra.mxu0 0.0
      %1056 = vmatprep.subr.mxu0 0.0
      %1057 = vmatpush2.msra.mxu0 0.0
      %1058 = vmatprep.subr.mxu0 0.0
      %1059 = vmatpush2.msra.mxu0 0.0
      %1060 = vmatprep.subr.mxu0 0.0
      %1061 = vmatpush2.msra.mxu0 0.0
      %1062 = vmatprep.subr.mxu0 %v907
      %1063 = vmatpush2.msra.mxu0 %v906
      %1064 = vmatprep.subr.mxu0 %v899
      %1065 = vmatpush2.msra.mxu0 %v898
      %1066 = vmatprep.subr.mxu0 %v891
      %1067 = vmatpush2.msra.mxu0 %v890
      %1068 = vmatprep.subr.mxu0 %v883
      %1069 = vmatpush2.msra.mxu0 %v882
      %1070 = vmatprep.subr.mxu0 %v875
      %1071 = vmatpush2.msra.mxu0 %v874
      %1072 = vmatprep.subr.mxu0 %v867
      %1073 = vmatpush2.msra.mxu0 %v866
      %1074 = vmatprep.subr.mxu0 %v859
      %1075 = vmatpush2.msra.mxu0 %v858
      %1076 = vmatprep.subr.mxu0 %v851
      %1077 = vmatpush2.msra.mxu0 %v850
      %1078 = vmatprep.mubr.f32.mxu0 %v914
      %1079 = vmatmul.mubr.f32.gmra.mxu0 %v708
      %v1080 = vpop.f32.mrf.mxu0
      %v1081 = vadd.f32 0.0, %v1080
      %v1082 = vpop.f32.mrf.mxu0
      %v1083 = vadd.f32 0.0, %v1082
      %1084 = vmatprep.mubr.f32.mxu0 %v917
      %1085 = vmatmul.mubr.f32.gmra.mxu0 %v710
      %v1086 = vpop.f32.mrf.mxu0
      %v1087 = vadd.f32 0.0, %v1086
      %v1088 = vpop.f32.mrf.mxu0
      %v1089 = vadd.f32 0.0, %v1088
      %1090 = vmatprep.mubr.f32.mxu0 %v920
      %1091 = vmatmul.mubr.f32.gmra.mxu0 %v712
      %v1092 = vpop.f32.mrf.mxu0
      %v1093 = vadd.f32 0.0, %v1092
      %v1094 = vpop.f32.mrf.mxu0
      %v1095 = vadd.f32 0.0, %v1094
      %1096 = vmatprep.mubr.f32.mxu0 %v923
      %1097 = vmatmul.mubr.f32.gmra.mxu0 %v714
      %v1098 = vpop.f32.mrf.mxu0
      %v1099 = vadd.f32 0.0, %v1098
      %v1100 = vpop.f32.mrf.mxu0
      %v1101 = vadd.f32 0.0, %v1100
      %1102 = vdwg.mxu0
      %1103 = vmatprep.subr.mxu0 %v845
      %1104 = vmatpush1.msra.mxu0 %v844
      %1105 = vmatprep.subr.mxu0 %v837
      %1106 = vmatpush1.msra.mxu0 %v836
      %1107 = vmatprep.subr.mxu0 %v829
      %1108 = vmatpush1.msra.mxu0 %v828
      %1109 = vmatprep.subr.mxu0 %v821
      %1110 = vmatpush1.msra.mxu0 %v820
      %1111 = vmatprep.subr.mxu0 %v813
      %1112 = vmatpush1.msra.mxu0 %v812
      %1113 = vmatprep.subr.mxu0 %v805
      %1114 = vmatpush1.msra.mxu0 %v804
      %1115 = vmatprep.subr.mxu0 %v797
      %1116 = vmatpush1.msra.mxu0 %v796
      %1117 = vmatprep.subr.mxu0 %v789
      %1118 = vmatpush1.msra.mxu0 %v788
      %1119 = vmatprep.subr.mxu0 %v781
      %1120 = vmatpush1.msra.mxu0 %v780
      %1121 = vmatprep.subr.mxu0 %v773
      %1122 = vmatpush1.msra.mxu0 %v772
      %1123 = vmatprep.subr.mxu0 %v765
      %1124 = vmatpush1.msra.mxu0 %v764
      %1125 = vmatprep.subr.mxu0 %v757
      %1126 = vmatpush1.msra.mxu0 %v756
      %1127 = vmatprep.subr.mxu0 %v749
      %1128 = vmatpush1.msra.mxu0 %v748
      %1129 = vmatprep.subr.mxu0 %v741
      %1130 = vmatpush1.msra.mxu0 %v740
      %1131 = vmatprep.subr.mxu0 %v733
      %1132 = vmatpush1.msra.mxu0 %v732
      %1133 = vmatprep.subr.mxu0 %v725
      %1134 = vmatpush1.msra.mxu0 %v724
      %1135 = vmatprep.subr.mxu0 0.0
      %1136 = vmatpush2.msra.mxu0 0.0
      %1137 = vmatprep.subr.mxu0 0.0
      %1138 = vmatpush2.msra.mxu0 0.0
      %1139 = vmatprep.subr.mxu0 0.0
      %1140 = vmatpush2.msra.mxu0 0.0
      %1141 = vmatprep.subr.mxu0 0.0
      %1142 = vmatpush2.msra.mxu0 0.0
      %1143 = vmatprep.subr.mxu0 0.0
      %1144 = vmatpush2.msra.mxu0 0.0
      %1145 = vmatprep.subr.mxu0 0.0
      %1146 = vmatpush2.msra.mxu0 0.0
      %1147 = vmatprep.subr.mxu0 0.0
      %1148 = vmatpush2.msra.mxu0 0.0
      %1149 = vmatprep.subr.mxu0 0.0
      %1150 = vmatpush2.msra.mxu0 0.0
      %1151 = vmatprep.subr.mxu0 %v909
      %1152 = vmatpush2.msra.mxu0 %v908
      %1153 = vmatprep.subr.mxu0 %v901
      %1154 = vmatpush2.msra.mxu0 %v900
      %1155 = vmatprep.subr.mxu0 %v893
      %1156 = vmatpush2.msra.mxu0 %v892
      %1157 = vmatprep.subr.mxu0 %v885
      %1158 = vmatpush2.msra.mxu0 %v884
      %1159 = vmatprep.subr.mxu0 %v877
      %1160 = vmatpush2.msra.mxu0 %v876
      %1161 = vmatprep.subr.mxu0 %v869
      %1162 = vmatpush2.msra.mxu0 %v868
      %1163 = vmatprep.subr.mxu0 %v861
      %1164 = vmatpush2.msra.mxu0 %v860
      %1165 = vmatprep.subr.mxu0 %v853
      %1166 = vmatpush2.msra.mxu0 %v852
      %1167 = vmatprep.mubr.f32.mxu0 %v914
      %1168 = vmatmul.mubr.f32.gmra.mxu0 %v708
      %v1169 = vpop.f32.mrf.mxu0
      %v1170 = vadd.f32 0.0, %v1169
      %v1171 = vpop.f32.mrf.mxu0
      %v1172 = vadd.f32 0.0, %v1171
      %1173 = vmatprep.mubr.f32.mxu0 %v917
      %1174 = vmatmul.mubr.f32.gmra.mxu0 %v710
      %v1175 = vpop.f32.mrf.mxu0
      %v1176 = vadd.f32 0.0, %v1175
      %v1177 = vpop.f32.mrf.mxu0
      %v1178 = vadd.f32 0.0, %v1177
      %1179 = vmatprep.mubr.f32.mxu0 %v920
      %1180 = vmatmul.mubr.f32.gmra.mxu0 %v712
      %v1181 = vpop.f32.mrf.mxu0
      %v1182 = vadd.f32 0.0, %v1181
      %v1183 = vpop.f32.mrf.mxu0
      %v1184 = vadd.f32 0.0, %v1183
      %1185 = vmatprep.mubr.f32.mxu0 %v923
      %1186 = vmatmul.mubr.f32.gmra.mxu0 %v714
      %v1187 = vpop.f32.mrf.mxu0
      %v1188 = vadd.f32 0.0, %v1187
      %v1189 = vpop.f32.mrf.mxu0
      %v1190 = vadd.f32 0.0, %v1189
      %1191 = vdwg.mxu0
      %1192 = vmatprep.subr.mxu0 %v847
      %1193 = vmatpush1.msra.mxu0 %v846
      %1194 = vmatprep.subr.mxu0 %v839
      %1195 = vmatpush1.msra.mxu0 %v838
      %1196 = vmatprep.subr.mxu0 %v831
      %1197 = vmatpush1.msra.mxu0 %v830
      %1198 = vmatprep.subr.mxu0 %v823
      %1199 = vmatpush1.msra.mxu0 %v822
      %1200 = vmatprep.subr.mxu0 %v815
      %1201 = vmatpush1.msra.mxu0 %v814
      %1202 = vmatprep.subr.mxu0 %v807
      %1203 = vmatpush1.msra.mxu0 %v806
      %1204 = vmatprep.subr.mxu0 %v799
      %1205 = vmatpush1.msra.mxu0 %v798
      %1206 = vmatprep.subr.mxu0 %v791
      %1207 = vmatpush1.msra.mxu0 %v790
      %1208 = vmatprep.subr.mxu0 %v783
      %1209 = vmatpush1.msra.mxu0 %v782
      %1210 = vmatprep.subr.mxu0 %v775
      %1211 = vmatpush1.msra.mxu0 %v774
      %1212 = vmatprep.subr.mxu0 %v767
      %1213 = vmatpush1.msra.mxu0 %v766
      %1214 = vmatprep.subr.mxu0 %v759
      %1215 = vmatpush1.msra.mxu0 %v758
      %1216 = vmatprep.subr.mxu0 %v751
      %1217 = vmatpush1.msra.mxu0 %v750
      %1218 = vmatprep.subr.mxu0 %v743
      %1219 = vmatpush1.msra.mxu0 %v742
      %1220 = vmatprep.subr.mxu0 %v735
      %1221 = vmatpush1.msra.mxu0 %v734
      %1222 = vmatprep.subr.mxu0 %v727
      %1223 = vmatpush1.msra.mxu0 %v726
      %1224 = vmatprep.subr.mxu0 0.0
      %1225 = vmatpush2.msra.mxu0 0.0
      %1226 = vmatprep.subr.mxu0 0.0
      %1227 = vmatpush2.msra.mxu0 0.0
      %1228 = vmatprep.subr.mxu0 0.0
      %1229 = vmatpush2.msra.mxu0 0.0
      %1230 = vmatprep.subr.mxu0 0.0
      %1231 = vmatpush2.msra.mxu0 0.0
      %1232 = vmatprep.subr.mxu0 0.0
      %1233 = vmatpush2.msra.mxu0 0.0
      %1234 = vmatprep.subr.mxu0 0.0
      %1235 = vmatpush2.msra.mxu0 0.0
      %1236 = vmatprep.subr.mxu0 0.0
      %1237 = vmatpush2.msra.mxu0 0.0
      %1238 = vmatprep.subr.mxu0 0.0
      %1239 = vmatpush2.msra.mxu0 0.0
      %1240 = vmatprep.subr.mxu0 %v911
      %1241 = vmatpush2.msra.mxu0 %v910
      %1242 = vmatprep.subr.mxu0 %v903
      %1243 = vmatpush2.msra.mxu0 %v902
      %1244 = vmatprep.subr.mxu0 %v895
      %1245 = vmatpush2.msra.mxu0 %v894
      %1246 = vmatprep.subr.mxu0 %v887
      %1247 = vmatpush2.msra.mxu0 %v886
      %1248 = vmatprep.subr.mxu0 %v879
      %1249 = vmatpush2.msra.mxu0 %v878
      %1250 = vmatprep.subr.mxu0 %v871
      %1251 = vmatpush2.msra.mxu0 %v870
      %1252 = vmatprep.subr.mxu0 %v863
      %1253 = vmatpush2.msra.mxu0 %v862
      %1254 = vmatprep.subr.mxu0 %v855
      %1255 = vmatpush2.msra.mxu0 %v854
      %1256 = vmatprep.mubr.f32.mxu0 %v914
      %1257 = vmatmul.mubr.f32.gmra.mxu0 %v708
      %v1258 = vpop.f32.mrf.mxu0
      %v1259 = vadd.f32 0.0, %v1258
      %v1260 = vpop.f32.mrf.mxu0
      %v1261 = vadd.f32 0.0, %v1260
      %1262 = vmatprep.mubr.f32.mxu0 %v917
      %1263 = vmatmul.mubr.f32.gmra.mxu0 %v710
      %v1264 = vpop.f32.mrf.mxu0
      %v1265 = vadd.f32 0.0, %v1264
      %v1266 = vpop.f32.mrf.mxu0
      %v1267 = vadd.f32 0.0, %v1266
      %1268 = vmatprep.mubr.f32.mxu0 %v920
      %1269 = vmatmul.mubr.f32.gmra.mxu0 %v712
      %v1270 = vpop.f32.mrf.mxu0
      %v1271 = vadd.f32 0.0, %v1270
      %v1272 = vpop.f32.mrf.mxu0
      %v1273 = vadd.f32 0.0, %v1272
      %1274 = vmatprep.mubr.f32.mxu0 %v923
      %1275 = vmatmul.mubr.f32.gmra.mxu0 %v714
      %v1276 = vpop.f32.mrf.mxu0
      %v1277 = vadd.f32 0.0, %v1276
      %v1278 = vpop.f32.mrf.mxu0
      %v1279 = vadd.f32 0.0, %v1278
      %1280 = vdwg.mxu0
      %v1281 = vadd.f32 %v516, %v524
      %v1282 = vadd.f32 %v1281, %v532
      %v1283 = vadd.f32 %v1282, %v540
      %v1284 = vadd.f32 %v1283, %v548
      %v1285 = vadd.f32 %v1284, %v556
      %v1286 = vadd.f32 %v1285, %v564
      %v1287 = vadd.f32 %v1286, %v572
      %v1288 = vadd.f32 %v1287, %v580
      %v1289 = vadd.f32 %v1288, %v588
      %v1290 = vadd.f32 %v1289, %v596
      %v1291 = vadd.f32 %v1290, %v604
      %v1292 = vadd.f32 %v1291, %v612
      %v1293 = vadd.f32 %v1292, %v620
      %v1294 = vadd.f32 %v1293, %v628
      %v1295 = vadd.f32 %v1294, %v636
      %v1296 = vadd.f32 %v1295, %v644
      %v1297 = vadd.f32 %v1296, %v652
      %v1298 = vadd.f32 %v1297, %v660
      %v1299 = vadd.f32 %v1298, %v668
      %v1300 = vadd.f32 %v1299, %v676
      %v1301 = vadd.f32 %v1300, %v684
      %v1302 = vadd.f32 %v1301, %v692
      %v1303 = vadd.f32 %v1302, %v700
      %v1304 = vrot.slane %v1303, 4
      %v1305 = vadd.f32 %v1303, %v1304
      %v1306 = vrot.slane %v1305, 2
      %v1307 = vadd.f32 %v1305, %v1306
      %v1308 = vrot.slane %v1307, 1
      %v1309 = vadd.f32 %v1307, %v1308
      %v1310 = vadd.f32 %v517, %v525
      %v1311 = vadd.f32 %v1310, %v533
      %v1312 = vadd.f32 %v1311, %v541
      %v1313 = vadd.f32 %v1312, %v549
      %v1314 = vadd.f32 %v1313, %v557
      %v1315 = vadd.f32 %v1314, %v565
      %v1316 = vadd.f32 %v1315, %v573
      %v1317 = vadd.f32 %v1316, %v581
      %v1318 = vadd.f32 %v1317, %v589
      %v1319 = vadd.f32 %v1318, %v597
      %v1320 = vadd.f32 %v1319, %v605
      %v1321 = vadd.f32 %v1320, %v613
      %v1322 = vadd.f32 %v1321, %v621
      %v1323 = vadd.f32 %v1322, %v629
      %v1324 = vadd.f32 %v1323, %v637
      %v1325 = vadd.f32 %v1324, %v645
      %v1326 = vadd.f32 %v1325, %v653
      %v1327 = vadd.f32 %v1326, %v661
      %v1328 = vadd.f32 %v1327, %v669
      %v1329 = vadd.f32 %v1328, %v677
      %v1330 = vadd.f32 %v1329, %v685
      %v1331 = vadd.f32 %v1330, %v693
      %v1332 = vadd.f32 %v1331, %v701
      %v1333 = vrot.slane %v1332, 4
      %v1334 = vadd.f32 %v1332, %v1333
      %v1335 = vrot.slane %v1334, 2
      %v1336 = vadd.f32 %v1334, %v1335
      %v1337 = vrot.slane %v1336, 1
      %v1338 = vadd.f32 %v1336, %v1337
      %v1339 = vadd.f32 %v518, %v526
      %v1340 = vadd.f32 %v1339, %v534
      %v1341 = vadd.f32 %v1340, %v542
      %v1342 = vadd.f32 %v1341, %v550
      %v1343 = vadd.f32 %v1342, %v558
      %v1344 = vadd.f32 %v1343, %v566
      %v1345 = vadd.f32 %v1344, %v574
      %v1346 = vadd.f32 %v1345, %v582
      %v1347 = vadd.f32 %v1346, %v590
      %v1348 = vadd.f32 %v1347, %v598
      %v1349 = vadd.f32 %v1348, %v606
      %v1350 = vadd.f32 %v1349, %v614
      %v1351 = vadd.f32 %v1350, %v622
      %v1352 = vadd.f32 %v1351, %v630
      %v1353 = vadd.f32 %v1352, %v638
      %v1354 = vadd.f32 %v1353, %v646
      %v1355 = vadd.f32 %v1354, %v654
      %v1356 = vadd.f32 %v1355, %v662
      %v1357 = vadd.f32 %v1356, %v670
      %v1358 = vadd.f32 %v1357, %v678
      %v1359 = vadd.f32 %v1358, %v686
      %v1360 = vadd.f32 %v1359, %v694
      %v1361 = vadd.f32 %v1360, %v702
      %v1362 = vrot.slane %v1361, 4
      %v1363 = vadd.f32 %v1361, %v1362
      %v1364 = vrot.slane %v1363, 2
      %v1365 = vadd.f32 %v1363, %v1364
      %v1366 = vrot.slane %v1365, 1
      %v1367 = vadd.f32 %v1365, %v1366
      %v1368 = vadd.f32 %v519, %v527
      %v1369 = vadd.f32 %v1368, %v535
      %v1370 = vadd.f32 %v1369, %v543
      %v1371 = vadd.f32 %v1370, %v551
      %v1372 = vadd.f32 %v1371, %v559
      %v1373 = vadd.f32 %v1372, %v567
      %v1374 = vadd.f32 %v1373, %v575
      %v1375 = vadd.f32 %v1374, %v583
      %v1376 = vadd.f32 %v1375, %v591
      %v1377 = vadd.f32 %v1376, %v599
      %v1378 = vadd.f32 %v1377, %v607
      %v1379 = vadd.f32 %v1378, %v615
      %v1380 = vadd.f32 %v1379, %v623
      %v1381 = vadd.f32 %v1380, %v631
      %v1382 = vadd.f32 %v1381, %v639
      %v1383 = vadd.f32 %v1382, %v647
      %v1384 = vadd.f32 %v1383, %v655
      %v1385 = vadd.f32 %v1384, %v663
      %v1386 = vadd.f32 %v1385, %v671
      %v1387 = vadd.f32 %v1386, %v679
      %v1388 = vadd.f32 %v1387, %v687
      %v1389 = vadd.f32 %v1388, %v695
      %v1390 = vadd.f32 %v1389, %v703
      %v1391 = vrot.slane %v1390, 4
      %v1392 = vadd.f32 %v1390, %v1391
      %v1393 = vrot.slane %v1392, 2
      %v1394 = vadd.f32 %v1392, %v1393
      %v1395 = vrot.slane %v1394, 1
      %v1396 = vadd.f32 %v1394, %v1395
      %v1397 = vadd.f32 %v520, %v528
      %v1398 = vadd.f32 %v1397, %v536
      %v1399 = vadd.f32 %v1398, %v544
      %v1400 = vadd.f32 %v1399, %v552
      %v1401 = vadd.f32 %v1400, %v560
      %v1402 = vadd.f32 %v1401, %v568
      %v1403 = vadd.f32 %v1402, %v576
      %v1404 = vadd.f32 %v1403, %v584
      %v1405 = vadd.f32 %v1404, %v592
      %v1406 = vadd.f32 %v1405, %v600
      %v1407 = vadd.f32 %v1406, %v608
      %v1408 = vadd.f32 %v1407, %v616
      %v1409 = vadd.f32 %v1408, %v624
      %v1410 = vadd.f32 %v1409, %v632
      %v1411 = vadd.f32 %v1410, %v640
      %v1412 = vadd.f32 %v1411, %v648
      %v1413 = vadd.f32 %v1412, %v656
      %v1414 = vadd.f32 %v1413, %v664
      %v1415 = vadd.f32 %v1414, %v672
      %v1416 = vadd.f32 %v1415, %v680
      %v1417 = vadd.f32 %v1416, %v688
      %v1418 = vadd.f32 %v1417, %v696
      %v1419 = vadd.f32 %v1418, %v704
      %v1420 = vrot.slane %v1419, 4
      %v1421 = vadd.f32 %v1419, %v1420
      %v1422 = vrot.slane %v1421, 2
      %v1423 = vadd.f32 %v1421, %v1422
      %v1424 = vrot.slane %v1423, 1
      %v1425 = vadd.f32 %v1423, %v1424
      %v1426 = vadd.f32 %v521, %v529
      %v1427 = vadd.f32 %v1426, %v537
      %v1428 = vadd.f32 %v1427, %v545
      %v1429 = vadd.f32 %v1428, %v553
      %v1430 = vadd.f32 %v1429, %v561
      %v1431 = vadd.f32 %v1430, %v569
      %v1432 = vadd.f32 %v1431, %v577
      %v1433 = vadd.f32 %v1432, %v585
      %v1434 = vadd.f32 %v1433, %v593
      %v1435 = vadd.f32 %v1434, %v601
      %v1436 = vadd.f32 %v1435, %v609
      %v1437 = vadd.f32 %v1436, %v617
      %v1438 = vadd.f32 %v1437, %v625
      %v1439 = vadd.f32 %v1438, %v633
      %v1440 = vadd.f32 %v1439, %v641
      %v1441 = vadd.f32 %v1440, %v649
      %v1442 = vadd.f32 %v1441, %v657
      %v1443 = vadd.f32 %v1442, %v665
      %v1444 = vadd.f32 %v1443, %v673
      %v1445 = vadd.f32 %v1444, %v681
      %v1446 = vadd.f32 %v1445, %v689
      %v1447 = vadd.f32 %v1446, %v697
      %v1448 = vadd.f32 %v1447, %v705
      %v1449 = vrot.slane %v1448, 4
      %v1450 = vadd.f32 %v1448, %v1449
      %v1451 = vrot.slane %v1450, 2
      %v1452 = vadd.f32 %v1450, %v1451
      %v1453 = vrot.slane %v1452, 1
      %v1454 = vadd.f32 %v1452, %v1453
      %v1455 = vadd.f32 %v522, %v530
      %v1456 = vadd.f32 %v1455, %v538
      %v1457 = vadd.f32 %v1456, %v546
      %v1458 = vadd.f32 %v1457, %v554
      %v1459 = vadd.f32 %v1458, %v562
      %v1460 = vadd.f32 %v1459, %v570
      %v1461 = vadd.f32 %v1460, %v578
      %v1462 = vadd.f32 %v1461, %v586
      %v1463 = vadd.f32 %v1462, %v594
      %v1464 = vadd.f32 %v1463, %v602
      %v1465 = vadd.f32 %v1464, %v610
      %v1466 = vadd.f32 %v1465, %v618
      %v1467 = vadd.f32 %v1466, %v626
      %v1468 = vadd.f32 %v1467, %v634
      %v1469 = vadd.f32 %v1468, %v642
      %v1470 = vadd.f32 %v1469, %v650
      %v1471 = vadd.f32 %v1470, %v658
      %v1472 = vadd.f32 %v1471, %v666
      %v1473 = vadd.f32 %v1472, %v674
      %v1474 = vadd.f32 %v1473, %v682
      %v1475 = vadd.f32 %v1474, %v690
      %v1476 = vadd.f32 %v1475, %v698
      %v1477 = vadd.f32 %v1476, %v706
      %v1478 = vrot.slane %v1477, 4
      %v1479 = vadd.f32 %v1477, %v1478
      %v1480 = vrot.slane %v1479, 2
      %v1481 = vadd.f32 %v1479, %v1480
      %v1482 = vrot.slane %v1481, 1
      %v1483 = vadd.f32 %v1481, %v1482
      %v1484 = vadd.f32 %v523, %v531
      %v1485 = vadd.f32 %v1484, %v539
      %v1486 = vadd.f32 %v1485, %v547
      %v1487 = vadd.f32 %v1486, %v555
      %v1488 = vadd.f32 %v1487, %v563
      %v1489 = vadd.f32 %v1488, %v571
      %v1490 = vadd.f32 %v1489, %v579
      %v1491 = vadd.f32 %v1490, %v587
      %v1492 = vadd.f32 %v1491, %v595
      %v1493 = vadd.f32 %v1492, %v603
      %v1494 = vadd.f32 %v1493, %v611
      %v1495 = vadd.f32 %v1494, %v619
      %v1496 = vadd.f32 %v1495, %v627
      %v1497 = vadd.f32 %v1496, %v635
      %v1498 = vadd.f32 %v1497, %v643
      %v1499 = vadd.f32 %v1498, %v651
      %v1500 = vadd.f32 %v1499, %v659
      %v1501 = vadd.f32 %v1500, %v667
      %v1502 = vadd.f32 %v1501, %v675
      %v1503 = vadd.f32 %v1502, %v683
      %v1504 = vadd.f32 %v1503, %v691
      %v1505 = vadd.f32 %v1504, %v699
      %v1506 = vadd.f32 %v1505, %v707
      %v1507 = vrot.slane %v1506, 4
      %v1508 = vadd.f32 %v1506, %v1507
      %v1509 = vrot.slane %v1508, 2
      %v1510 = vadd.f32 %v1508, %v1509
      %v1511 = vrot.slane %v1510, 1
      %v1512 = vadd.f32 %v1510, %v1511
      %v1513 = vmax.f32 %v1309, 0.0
      %v1514 = vmax.f32 %v1338, 0.0
      %v1515 = vmax.f32 %v1367, 0.0
      %v1516 = vmax.f32 %v1396, 0.0
      %v1517 = vmax.f32 %v1425, 0.0
      %v1518 = vmax.f32 %v1454, 0.0
      %v1519 = vmax.f32 %v1483, 0.0
      %v1520 = vmax.f32 %v1512, 0.0
      %v1521 = vmin.f32 %v1513, 1.0
      %v1522 = vmin.f32 %v1514, 1.0
      %v1523 = vmin.f32 %v1515, 1.0
      %v1524 = vmin.f32 %v1516, 1.0
      %v1525 = vmin.f32 %v1517, 1.0
      %v1526 = vmin.f32 %v1518, 1.0
      %v1527 = vmin.f32 %v1519, 1.0
      %v1528 = vmin.f32 %v1520, 1.0
      %v1529 = vadd.f32 %v1309, 1e-08
      %v1530 = vadd.f32 %v1338, 1e-08
      %v1531 = vadd.f32 %v1367, 1e-08
      %v1532 = vadd.f32 %v1396, 1e-08
      %v1533 = vadd.f32 %v1425, 1e-08
      %v1534 = vadd.f32 %v1454, 1e-08
      %v1535 = vadd.f32 %v1483, 1e-08
      %v1536 = vadd.f32 %v1512, 1e-08
      %v1537 = vrcp.pop %v1529
      %v1538 = vrcp.pop %v1530
      %v1539 = vrcp.pop %v1531
      %v1540 = vrcp.pop %v1532
      %v1541 = vrcp.pop %v1533
      %v1542 = vrcp.pop %v1534
      %v1543 = vrcp.pop %v1535
      %v1544 = vrcp.pop %v1536
      %v1545 = vmul.f32 %v1537, 192.0
      %v1546 = vmul.f32 %v1538, 192.0
      %v1547 = vmul.f32 %v1539, 192.0
      %v1548 = vmul.f32 %v1540, 192.0
      %v1549 = vmul.f32 %v1541, 192.0
      %v1550 = vmul.f32 %v1542, 192.0
      %v1551 = vmul.f32 %v1543, 192.0
      %v1552 = vmul.f32 %v1544, 192.0
      %v1553 = vmul.f32 %v1545, %v1521
      %v1554 = vmul.f32 %v1546, %v1522
      %v1555 = vmul.f32 %v1547, %v1523
      %v1556 = vmul.f32 %v1548, %v1524
      %v1557 = vmul.f32 %v1549, %v1525
      %v1558 = vmul.f32 %v1550, %v1526
      %v1559 = vmul.f32 %v1551, %v1527
      %v1560 = vmul.f32 %v1552, %v1528
      %v1561 = vmul.f32 %v992, %v1553
      %v1562 = vmul.f32 %v994, %v1554
      %v1563 = vmul.f32 %v1081, %v1555
      %v1564 = vmul.f32 %v1083, %v1556
      %v1565 = vmul.f32 %v1170, %v1557
      %v1566 = vmul.f32 %v1172, %v1558
      %v1567 = vmul.f32 %v1259, %v1559
      %v1568 = vmul.f32 %v1261, %v1560
      %v1569 = vmul.f32 %v998, %v1553
      %v1570 = vmul.f32 %v1000, %v1554
      %v1571 = vmul.f32 %v1087, %v1555
      %v1572 = vmul.f32 %v1089, %v1556
      %v1573 = vmul.f32 %v1176, %v1557
      %v1574 = vmul.f32 %v1178, %v1558
      %v1575 = vmul.f32 %v1265, %v1559
      %v1576 = vmul.f32 %v1267, %v1560
      %v1577 = vmul.f32 %v1004, %v1553
      %v1578 = vmul.f32 %v1006, %v1554
      %v1579 = vmul.f32 %v1093, %v1555
      %v1580 = vmul.f32 %v1095, %v1556
      %v1581 = vmul.f32 %v1182, %v1557
      %v1582 = vmul.f32 %v1184, %v1558
      %v1583 = vmul.f32 %v1271, %v1559
      %v1584 = vmul.f32 %v1273, %v1560
      %v1585 = vmul.f32 %v1010, %v1553
      %v1586 = vmul.f32 %v1012, %v1554
      %v1587 = vmul.f32 %v1099, %v1555
      %v1588 = vmul.f32 %v1101, %v1556
      %v1589 = vmul.f32 %v1188, %v1557
      %v1590 = vmul.f32 %v1190, %v1558
      %v1591 = vmul.f32 %v1277, %v1559
      %v1592 = vmul.f32 %v1279, %v1560
      %1594 = vset.pattern.permute.xlu0 0
      %1595 = vperm.xlu0 %1594, %v716
      %v1596 = vpop.permute.xlu0 %1595
      %1599 = vset.pattern.permute.xlu0 0
      %1600 = vperm.xlu0 %1599, %v717
      %v1601 = vpop.permute.xlu0 %1600
      %1604 = vset.pattern.permute.xlu0 0
      %1605 = vperm.xlu0 %1604, %v718
      %v1606 = vpop.permute.xlu0 %1605
      %1609 = vset.pattern.permute.xlu0 0
      %1610 = vperm.xlu0 %1609, %v719
      %v1611 = vpop.permute.xlu0 %1610
      %v1613 = vadd.f32 %v1561, %v1596
      %v1614 = vadd.f32 %v1562, %v1596
      %v1615 = vadd.f32 %v1563, %v1596
      %v1616 = vadd.f32 %v1564, %v1596
      %v1617 = vadd.f32 %v1565, %v1596
      %v1618 = vadd.f32 %v1566, %v1596
      %v1619 = vadd.f32 %v1567, %v1596
      %v1620 = vadd.f32 %v1568, %v1596
      %v1621 = vadd.f32 %v1569, %v1601
      %v1622 = vadd.f32 %v1570, %v1601
      %v1623 = vadd.f32 %v1571, %v1601
      %v1624 = vadd.f32 %v1572, %v1601
      %v1625 = vadd.f32 %v1573, %v1601
      %v1626 = vadd.f32 %v1574, %v1601
      %v1627 = vadd.f32 %v1575, %v1601
      %v1628 = vadd.f32 %v1576, %v1601
      %v1629 = vadd.f32 %v1577, %v1606
      %v1630 = vadd.f32 %v1578, %v1606
      %v1631 = vadd.f32 %v1579, %v1606
      %v1632 = vadd.f32 %v1580, %v1606
      %v1633 = vadd.f32 %v1581, %v1606
      %v1634 = vadd.f32 %v1582, %v1606
      %v1635 = vadd.f32 %v1583, %v1606
      %v1636 = vadd.f32 %v1584, %v1606
      %v1637 = vadd.f32 %v1585, %v1611
      %v1638 = vadd.f32 %v1586, %v1611
      %v1639 = vadd.f32 %v1587, %v1611
      %v1640 = vadd.f32 %v1588, %v1611
      %v1641 = vadd.f32 %v1589, %v1611
      %v1642 = vadd.f32 %v1590, %v1611
      %v1643 = vadd.f32 %v1591, %v1611
      %v1644 = vadd.f32 %v1592, %v1611
      %v1645 = vmul.f32 %v1613, %v1521
      %v1646 = vmul.f32 %v1614, %v1522
      %v1647 = vmul.f32 %v1615, %v1523
      %v1648 = vmul.f32 %v1616, %v1524
      %v1649 = vmul.f32 %v1617, %v1525
      %v1650 = vmul.f32 %v1618, %v1526
      %v1651 = vmul.f32 %v1619, %v1527
      %v1652 = vmul.f32 %v1620, %v1528
      %v1653 = vmul.f32 %v1621, %v1521
      %v1654 = vmul.f32 %v1622, %v1522
      %v1655 = vmul.f32 %v1623, %v1523
      %v1656 = vmul.f32 %v1624, %v1524
      %v1657 = vmul.f32 %v1625, %v1525
      %v1658 = vmul.f32 %v1626, %v1526
      %v1659 = vmul.f32 %v1627, %v1527
      %v1660 = vmul.f32 %v1628, %v1528
      %v1661 = vmul.f32 %v1629, %v1521
      %v1662 = vmul.f32 %v1630, %v1522
      %v1663 = vmul.f32 %v1631, %v1523
      %v1664 = vmul.f32 %v1632, %v1524
      %v1665 = vmul.f32 %v1633, %v1525
      %v1666 = vmul.f32 %v1634, %v1526
      %v1667 = vmul.f32 %v1635, %v1527
      %v1668 = vmul.f32 %v1636, %v1528
      %v1669 = vmul.f32 %v1637, %v1521
      %v1670 = vmul.f32 %v1638, %v1522
      %v1671 = vmul.f32 %v1639, %v1523
      %v1672 = vmul.f32 %v1640, %v1524
      %v1673 = vmul.f32 %v1641, %v1525
      %v1674 = vmul.f32 %v1642, %v1526
      %v1675 = vmul.f32 %v1643, %v1527
      %v1676 = vmul.f32 %v1644, %v1528
      %vm1677 = vcmp.ge.f32.partialorder %v1645, 0.0
      %vm1678 = vcmp.ge.f32.partialorder %v1646, 0.0
      %vm1679 = vcmp.ge.f32.partialorder %v1647, 0.0
      %vm1680 = vcmp.ge.f32.partialorder %v1648, 0.0
      %vm1681 = vcmp.ge.f32.partialorder %v1649, 0.0
      %vm1682 = vcmp.ge.f32.partialorder %v1650, 0.0
      %vm1683 = vcmp.ge.f32.partialorder %v1651, 0.0
      %vm1684 = vcmp.ge.f32.partialorder %v1652, 0.0
      %vm1685 = vcmp.ge.f32.partialorder %v1653, 0.0
      %vm1686 = vcmp.ge.f32.partialorder %v1654, 0.0
      %vm1687 = vcmp.ge.f32.partialorder %v1655, 0.0
      %vm1688 = vcmp.ge.f32.partialorder %v1656, 0.0
      %vm1689 = vcmp.ge.f32.partialorder %v1657, 0.0
      %vm1690 = vcmp.ge.f32.partialorder %v1658, 0.0
      %vm1691 = vcmp.ge.f32.partialorder %v1659, 0.0
      %vm1692 = vcmp.ge.f32.partialorder %v1660, 0.0
      %vm1693 = vcmp.ge.f32.partialorder %v1661, 0.0
      %vm1694 = vcmp.ge.f32.partialorder %v1662, 0.0
      %vm1695 = vcmp.ge.f32.partialorder %v1663, 0.0
      %vm1696 = vcmp.ge.f32.partialorder %v1664, 0.0
      %vm1697 = vcmp.ge.f32.partialorder %v1665, 0.0
      %vm1698 = vcmp.ge.f32.partialorder %v1666, 0.0
      %vm1699 = vcmp.ge.f32.partialorder %v1667, 0.0
      %vm1700 = vcmp.ge.f32.partialorder %v1668, 0.0
      %vm1701 = vcmp.ge.f32.partialorder %v1669, 0.0
      %vm1702 = vcmp.ge.f32.partialorder %v1670, 0.0
      %vm1703 = vcmp.ge.f32.partialorder %v1671, 0.0
      %vm1704 = vcmp.ge.f32.partialorder %v1672, 0.0
      %vm1705 = vcmp.ge.f32.partialorder %v1673, 0.0
      %vm1706 = vcmp.ge.f32.partialorder %v1674, 0.0
      %vm1707 = vcmp.ge.f32.partialorder %v1675, 0.0
      %vm1708 = vcmp.ge.f32.partialorder %v1676, 0.0
      %v1709 = vmul.f32 %v1645, 0.1
      %v1710 = vmul.f32 %v1646, 0.1
      %v1711 = vmul.f32 %v1647, 0.1
      %v1712 = vmul.f32 %v1648, 0.1
      %v1713 = vmul.f32 %v1649, 0.1
      %v1714 = vmul.f32 %v1650, 0.1
      %v1715 = vmul.f32 %v1651, 0.1
      %v1716 = vmul.f32 %v1652, 0.1
      %v1717 = vmul.f32 %v1653, 0.1
      %v1718 = vmul.f32 %v1654, 0.1
      %v1719 = vmul.f32 %v1655, 0.1
      %v1720 = vmul.f32 %v1656, 0.1
      %v1721 = vmul.f32 %v1657, 0.1
      %v1722 = vmul.f32 %v1658, 0.1
      %v1723 = vmul.f32 %v1659, 0.1
      %v1724 = vmul.f32 %v1660, 0.1
      %v1725 = vmul.f32 %v1661, 0.1
      %v1726 = vmul.f32 %v1662, 0.1
      %v1727 = vmul.f32 %v1663, 0.1
      %v1728 = vmul.f32 %v1664, 0.1
      %v1729 = vmul.f32 %v1665, 0.1
      %v1730 = vmul.f32 %v1666, 0.1
      %v1731 = vmul.f32 %v1667, 0.1
      %v1732 = vmul.f32 %v1668, 0.1
      %v1733 = vmul.f32 %v1669, 0.1
      %v1734 = vmul.f32 %v1670, 0.1
      %v1735 = vmul.f32 %v1671, 0.1
      %v1736 = vmul.f32 %v1672, 0.1
      %v1737 = vmul.f32 %v1673, 0.1
      %v1738 = vmul.f32 %v1674, 0.1
      %v1739 = vmul.f32 %v1675, 0.1
      %v1740 = vmul.f32 %v1676, 0.1
      %v1741 = vsel %vm1677, %v1645, %v1709
      %v1742 = vsel %vm1678, %v1646, %v1710
      %v1743 = vsel %vm1679, %v1647, %v1711
      %v1744 = vsel %vm1680, %v1648, %v1712
      %v1745 = vsel %vm1681, %v1649, %v1713
      %v1746 = vsel %vm1682, %v1650, %v1714
      %v1747 = vsel %vm1683, %v1651, %v1715
      %v1748 = vsel %vm1684, %v1652, %v1716
      %v1749 = vsel %vm1685, %v1653, %v1717
      %v1750 = vsel %vm1686, %v1654, %v1718
      %v1751 = vsel %vm1687, %v1655, %v1719
      %v1752 = vsel %vm1688, %v1656, %v1720
      %v1753 = vsel %vm1689, %v1657, %v1721
      %v1754 = vsel %vm1690, %v1658, %v1722
      %v1755 = vsel %vm1691, %v1659, %v1723
      %v1756 = vsel %vm1692, %v1660, %v1724
      %v1757 = vsel %vm1693, %v1661, %v1725
      %v1758 = vsel %vm1694, %v1662, %v1726
      %v1759 = vsel %vm1695, %v1663, %v1727
      %v1760 = vsel %vm1696, %v1664, %v1728
      %v1761 = vsel %vm1697, %v1665, %v1729
      %v1762 = vsel %vm1698, %v1666, %v1730
      %v1763 = vsel %vm1699, %v1667, %v1731
      %v1764 = vsel %vm1700, %v1668, %v1732
      %v1765 = vsel %vm1701, %v1669, %v1733
      %v1766 = vsel %vm1702, %v1670, %v1734
      %v1767 = vsel %vm1703, %v1671, %v1735
      %v1768 = vsel %vm1704, %v1672, %v1736
      %v1769 = vsel %vm1705, %v1673, %v1737
      %v1770 = vsel %vm1706, %v1674, %v1738
      %v1771 = vsel %vm1707, %v1675, %v1739
      %v1772 = vsel %vm1708, %v1676, %v1740
      %1773 = vst [vmem:[%s312] sm:$0xff] %v1741
      %1774 = vst [vmem:[%s312 + $0x8] sm:$0xff] %v1742
      %1775 = vst [vmem:[%s312 + $0x10] sm:$0xff] %v1743
      %1776 = vst [vmem:[%s312 + $0x18] sm:$0xff] %v1744
      %1777 = vst [vmem:[%s312 + $0x20] sm:$0xff] %v1745
      %1778 = vst [vmem:[%s312 + $0x28] sm:$0xff] %v1746
      %1779 = vst [vmem:[%s312 + $0x30] sm:$0xff] %v1747
      %1780 = vst [vmem:[%s312 + $0x38] sm:$0xff] %v1748
      %1781 = vst [vmem:[%s312 + $0x40] sm:$0xff] %v1749
      %1782 = vst [vmem:[%s312 + $0x48] sm:$0xff] %v1750
      %1783 = vst [vmem:[%s312 + $0x50] sm:$0xff] %v1751
      %1784 = vst [vmem:[%s312 + $0x58] sm:$0xff] %v1752
      %1785 = vst [vmem:[%s312 + $0x60] sm:$0xff] %v1753
      %1786 = vst [vmem:[%s312 + $0x68] sm:$0xff] %v1754
      %1787 = vst [vmem:[%s312 + $0x70] sm:$0xff] %v1755
      %1788 = vst [vmem:[%s312 + $0x78] sm:$0xff] %v1756
      %1789 = vst [vmem:[%s312 + $0x80] sm:$0xff] %v1757
      %1790 = vst [vmem:[%s312 + $0x88] sm:$0xff] %v1758
      %1791 = vst [vmem:[%s312 + $0x90] sm:$0xff] %v1759
      %1792 = vst [vmem:[%s312 + $0x98] sm:$0xff] %v1760
      %1793 = vst [vmem:[%s312 + $0xa0] sm:$0xff] %v1761
      %1794 = vst [vmem:[%s312 + $0xa8] sm:$0xff] %v1762
      %1795 = vst [vmem:[%s312 + $0xb0] sm:$0xff] %v1763
      %1796 = vst [vmem:[%s312 + $0xb8] sm:$0xff] %v1764
      %1797 = vst [vmem:[%s312 + $0xc0] sm:$0xff] %v1765
      %1798 = vst [vmem:[%s312 + $0xc8] sm:$0xff] %v1766
      %1799 = vst [vmem:[%s312 + $0xd0] sm:$0xff] %v1767
      %1800 = vst [vmem:[%s312 + $0xd8] sm:$0xff] %v1768
      %1801 = vst [vmem:[%s312 + $0xe0] sm:$0xff] %v1769
      %1802 = vst [vmem:[%s312 + $0xe8] sm:$0xff] %v1770
      %1803 = vst [vmem:[%s312 + $0xf0] sm:$0xff] %v1771
      %1804 = vst [vmem:[%s312 + $0xf8] sm:$0xff] %v1772
      %1805 = vst [vmem:[%s322] sm:$0xff] %v1521
      %1806 = vst [vmem:[%s322 + $0x8] sm:$0xff] %v1522
      %1807 = vst [vmem:[%s322 + $0x10] sm:$0xff] %v1523
      %1808 = vst [vmem:[%s322 + $0x18] sm:$0xff] %v1524
      %1809 = vst [vmem:[%s322 + $0x20] sm:$0xff] %v1525
      %1810 = vst [vmem:[%s322 + $0x28] sm:$0xff] %v1526
      %1811 = vst [vmem:[%s322 + $0x30] sm:$0xff] %v1527
      %1812 = vst [vmem:[%s322 + $0x38] sm:$0xff] %v1528
      %1813 = vst [vmem:[%s322 + $0x40] sm:$0xff] %v1521
      %1814 = vst [vmem:[%s322 + $0x48] sm:$0xff] %v1522
      %1815 = vst [vmem:[%s322 + $0x50] sm:$0xff] %v1523
      %1816 = vst [vmem:[%s322 + $0x58] sm:$0xff] %v1524
      %1817 = vst [vmem:[%s322 + $0x60] sm:$0xff] %v1525
      %1818 = vst [vmem:[%s322 + $0x68] sm:$0xff] %v1526
      %1819 = vst [vmem:[%s322 + $0x70] sm:$0xff] %v1527
      %1820 = vst [vmem:[%s322 + $0x78] sm:$0xff] %v1528
      %1821 = vst [vmem:[%s322 + $0x80] sm:$0xff] %v1521
      %1822 = vst [vmem:[%s322 + $0x88] sm:$0xff] %v1522
      %1823 = vst [vmem:[%s322 + $0x90] sm:$0xff] %v1523
      %1824 = vst [vmem:[%s322 + $0x98] sm:$0xff] %v1524
      %1825 = vst [vmem:[%s322 + $0xa0] sm:$0xff] %v1525
      %1826 = vst [vmem:[%s322 + $0xa8] sm:$0xff] %v1526
      %1827 = vst [vmem:[%s322 + $0xb0] sm:$0xff] %v1527
      %1828 = vst [vmem:[%s322 + $0xb8] sm:$0xff] %v1528
      %1829 = vst [vmem:[%s322 + $0xc0] sm:$0xff] %v1521
      %1830 = vst [vmem:[%s322 + $0xc8] sm:$0xff] %v1522
      %1831 = vst [vmem:[%s322 + $0xd0] sm:$0xff] %v1523
      %1832 = vst [vmem:[%s322 + $0xd8] sm:$0xff] %v1524
      %1833 = vst [vmem:[%s322 + $0xe0] sm:$0xff] %v1525
      %1834 = vst [vmem:[%s322 + $0xe8] sm:$0xff] %v1526
      %1835 = vst [vmem:[%s322 + $0xf0] sm:$0xff] %v1527
      %1836 = vst [vmem:[%s322 + $0xf8] sm:$0xff] %v1528
      %s1837 = smul.u32 8, %s22
      %p1838 = scmp.lt.s32.totalorder %s21, 1
      %s1839 = scalar_select %p1838, %s21, 1
      %p1840 = scmp.lt.s32.totalorder %s1837, 7
      %s1841 = scalar_select %p1840, %s1837, 7
      %s1842 = smul.addr %s1839, 32
      %s1843 = sadd.s32 %s1841, %s1842
      %s1844 = smul.addr %s1843, 8
      %s1845 = scalar_lea.vmem %s4, %s1844
      %s1846 = smul.u32 8, %s22
      %p1847 = scmp.lt.s32.totalorder %s21, 1
      %s1848 = scalar_select %p1847, %s21, 1
      %p1849 = scmp.lt.s32.totalorder %s1846, 7
      %s1850 = scalar_select %p1849, %s1846, 7
      %s1851 = smul.addr %s1848, 32
      %s1852 = sadd.s32 %s1850, %s1851
      %s1853 = smul.addr %s1852, 8
      %s1854 = scalar_lea.vmem %s5, %s1853
      // Predicated region
      $region37: #{feature_aggregator_forward.1} parent=35 // pred_check
        %p1855 = pneg %p147
      $region38: #{feature_aggregator_forward.1} parent=35 // pred_check_branch
        %1857 = sbr.rel (%p1855) target = $region40
      $region39: #{feature_aggregator_forward.1} parent=35 // pred_region
        %s1858 = smul.u32 8, %s22
      $region40: #{feature_aggregator_forward.1} parent=35 // pred_fallthru
        _
      // Predicated region
      $region41: #{feature_aggregator_forward.1} parent=35 // pred_check
        %p1859 = pneg %p175
      $region42: #{feature_aggregator_forward.1} parent=35 // pred_check_branch
        %1861 = sbr.rel (%p1859) target = $region44
      $region43: #{feature_aggregator_forward.1} parent=35 // pred_region
        %s1862 = smul.u32 8, %s22
      $region44: #{feature_aggregator_forward.1} parent=35 // pred_fallthru
        _
    $region36: #{feature_aggregator_forward.1} parent=5 // pred_fallthru
      _
    %p1863 = scmp.le.s32.totalorder 2, %s12
    // Predicated region
    $region45: #{feature_aggregator_forward.1} parent=5 // pred_check
      %p1864 = pneg %p1863
    $region46: #{feature_aggregator_forward.1} parent=5 // pred_check_branch
      %1866 = sbr.rel (%p1864) target = $region48
    $region47: #{feature_aggregator_forward.1} parent=5 // pred_region
      %s1867 = ssub.s32 %s12, 2
      // Predicated region
      $region49: #{feature_aggregator_forward.1} parent=47 // pred_check
        %p1868 = pneg %p153
      $region50: #{feature_aggregator_forward.1} parent=47 // pred_check_branch
        %1870 = sbr.rel (%p1868) target = $region52
      $region51: #{feature_aggregator_forward.1} parent=47 // pred_region
        %s1871 = smul.u32 8, %s24
        %p1872 = scmp.lt.s32.totalorder %s23, 1
        %s1873 = scalar_select %p1872, %s23, 1
        %p1874 = scmp.lt.s32.totalorder %s1871, 7
        %s1875 = scalar_select %p1874, %s1871, 7
        %s1876 = smul.addr %s1873, 32
        %s1877 = sadd.s32 %s1875, %s1876
        %s1878 = smul.addr %s1877, 8
        %s1879 = scalar_lea.vmem %s4, %s1878
      $region52: #{feature_aggregator_forward.1} parent=47 // pred_fallthru
        _
      // Predicated region
      $region53: #{feature_aggregator_forward.1} parent=47 // pred_check
        %p1880 = pneg %p181
      $region54: #{feature_aggregator_forward.1} parent=47 // pred_check_branch
        %1882 = sbr.rel (%p1880) target = $region56
      $region55: #{feature_aggregator_forward.1} parent=47 // pred_region
        %s1883 = smul.u32 8, %s24
        %p1884 = scmp.lt.s32.totalorder %s23, 1
        %s1885 = scalar_select %p1884, %s23, 1
        %p1886 = scmp.lt.s32.totalorder %s1883, 7
        %s1887 = scalar_select %p1886, %s1883, 7
        %s1888 = smul.addr %s1885, 32
        %s1889 = sadd.s32 %s1887, %s1888
        %s1890 = smul.addr %s1889, 8
        %s1891 = scalar_lea.vmem %s5, %s1890
      $region56: #{feature_aggregator_forward.1} parent=47 // pred_fallthru
        _
    $region48: #{feature_aggregator_forward.1} parent=5 // pred_fallthru
      _
  $region6: #{feature_aggregator_forward.1} parent=0 // loop_footer
    %s16 = sadd.s32 1, %s12
  $region7: #{feature_aggregator_forward.1} parent=0 // loop_footer_branch
    %11 = sbr.rel target = $region3
  $region8: #{feature_aggregator_forward.1} parent=0 // loop_exit
    _

</llo_original>
